<compile_context>
chip_gen: v6e
topology: v6e:2x2x1
jax: 0.10.0
libtpu: 0.0.40
codegen_flags: <defaults>
</compile_context>

<pallas_src>
import numpy as np
import jax
import jax.numpy as jnp
from jax.experimental import pallas as pl
from jax.experimental.pallas import tpu as pltpu

N_FFT = 256
HOP = 128
N_FREQ = N_FFT // 2 + 1        # 129 one-sided bins
F_PAD = 136                    # 129 rounded up to a multiple of 8 (output sublanes)


def _cdiv(a, b):
    return (a + b - 1) // b


def _packed_basis():
    """(256, 256) bf16 Hann-windowed DFT basis, packed along the output columns.

    column k       (k = 0..127): window * cos(2*pi*n*k/256)    (real, bins 0..127)
    column 128               :   window * cos(pi*n)            (real, Nyquist bin)
    column 128+k   (k = 1..127): -window * sin(2*pi*n*k/256)   (imag, bins 1..127)
    Rows 0..127 multiply the first hop-chunk of a frame, rows 128..255 the second.
    """
    n = np.arange(N_FFT, dtype=np.float64)
    # torch.hann_window(256) is periodic: 0.5 * (1 - cos(2*pi*n/N))
    window = 0.5 * (1.0 - np.cos(2.0 * np.pi * n / N_FFT))
    w = np.zeros((N_FFT, N_FFT), np.float64)
    for k in range(N_FREQ - 1):                     # 0..127 -> real basis
        w[:, k] = window * np.cos(2.0 * np.pi * n * k / N_FFT)
    w[:, 128] = window * np.cos(np.pi * n)          # Nyquist real basis
    for k in range(1, N_FREQ - 1):                  # 1..127 -> imag basis
        w[:, 128 + k] = -window * np.sin(2.0 * np.pi * n * k / N_FFT)
    return jnp.asarray(w.astype(np.float32)).astype(jnp.bfloat16)


def _stft_kernel(tile_ref, w_ref, o_ref):
    # tile_ref: (1, 1, TMf+1, 128) bf16 hop-chunks (row j = samples [j*128, (j+1)*128))
    # w_ref:    (256, 256) bf16 packed windowed-DFT basis
    # o_ref:    (1, 136, TMf) freq-major log-spectrogram tile (rows 0..128 valid)
    tmf = o_ref.shape[2]
    t = tile_ref[0, 0]                                        # (TMf+1, 128) bf16

    # frame j = [chunk j, chunk j+1].  Two bf16 K=128 matmuls over the full tile;
    # the one-row shift is applied on the f32 results.
    p = jnp.dot(t, w_ref[0:HOP, :], preferred_element_type=jnp.float32)
    q = jnp.dot(t, w_ref[HOP:N_FFT, :], preferred_element_type=jnp.float32)
    y = p[0:tmf, :] + q[1:tmf + 1, :]                         # (TMf, 256) f32

    # transpose on the XLU so the output leaves the kernel freq-major (item 3)
    yt = jnp.transpose(y)                                     # (256, TMf)
    re = yt[0:128, :]                                         # real, bins 0..127
    oth = yt[128:256, :]                 # row 0: Nyquist real; rows 1..127: imag bins 1..127
    row = jax.lax.broadcasted_iota(jnp.int32, oth.shape, 0)
    im = jnp.where(row == 0, 0.0, oth)                        # bin 0 has no imaginary part
    power_lo = re * re + im * im                              # |X|^2, bins 0..127

    # 0.5*log10(power + 1e-18) == log10(sqrt(power) + 1e-9) except for silent bins
    # (same -9 floor); halves the EUP work (item 4).
    o_ref[0, 0:128, :] = (0.5 * jnp.log10(power_lo + 1e-18)).astype(o_ref.dtype)
    oth8 = oth[0:8, :]
    power_hi = oth8 * oth8               # row 0 = Nyquist bin; rows 1..7 junk (sliced off)
    o_ref[0, 128:F_PAD, :] = (0.5 * jnp.log10(power_hi + 1e-18)).astype(o_ref.dtype)


def st_layer(signal, out_dtype=jnp.float32):
    """Pallas equivalent of STlayer.forward.

    signal: (B, 1, L) float32 (L >= 129 for the reflect pad) ->
    (B, 129, 1 + L//128) log10(|STFT|), matching torch.stft(n_fft=256,
    hop_length=128, window=hann(256), center=True, reflect pad, onesided)
    followed by sqrt(re^2 + im^2) and log10(. + 1e-9).
    """
    sig = jnp.squeeze(signal)                                 # (B, L) (or (L,))
    if sig.ndim == 1:
        sig = sig[None, :]
    B, L = sig.shape
    n_frames = 1 + L // HOP

    # ---- glue (JAX): reflect pad + hop-chunk tiling with a one-row halo ------
    padded = jnp.pad(sig, ((0, 0), (N_FFT // 2, N_FFT // 2)), mode="reflect")

    TMf = 256                                 # frames per tile (item 5: cap at 256)
    n_tiles = _cdiv(n_frames, TMf)
    if B * n_tiles < 2 and n_frames > 128:    # item 6: give v7x megacore >= 2 steps
        TMf = 128
        n_tiles = _cdiv(n_frames, TMf)
    nf_pad = n_tiles * TMf

    n_chunks = nf_pad + 1                     # frame f needs chunks f and f+1
    need = n_chunks * HOP
    if padded.shape[1] < need:                # zero-pad; extra frames are sliced off
        padded = jnp.pad(padded, ((0, 0), (0, need - padded.shape[1])))
    chunks = padded[:, :need].reshape(B, n_chunks, HOP)
    main = chunks[:, :nf_pad].reshape(B, n_tiles, TMf, HOP)
    halo = chunks[:, TMf::TMf][:, :n_tiles]                        # chunk (t+1)*TMf
    tiles = jnp.concatenate([main, halo[:, :, None, :]], axis=2)   # (B, nt, TMf+1, 128)
    tiles = tiles.astype(jnp.bfloat16)        # bf16 feed for the MXU (item 1)

    w = _packed_basis()

    out = pl.pallas_call(
        _stft_kernel,
        out_shape=jax.ShapeDtypeStruct((B, F_PAD, nf_pad), out_dtype),
        grid_spec=pltpu.PrefetchScalarGridSpec(
            num_scalar_prefetch=0,
            grid=(B, n_tiles),
            in_specs=[
                pl.BlockSpec((1, 1, TMf + 1, HOP), lambda b, t: (b, t, 0, 0)),
                # constant block index -> the basis is DMA'd once, not per step
                pl.BlockSpec((N_FFT, N_FFT), lambda b, t: (0, 0)),
            ],
            out_specs=pl.BlockSpec((1, F_PAD, TMf), lambda b, t: (b, 0, t)),
        ),
        compiler_params=pltpu.CompilerParams(
            dimension_semantics=("parallel", "parallel")),
        cost_estimate=pl.CostEstimate(
            flops=2 * B * nf_pad * N_FFT * N_FFT,
            transcendentals=B * nf_pad * F_PAD,
            bytes_accessed=(tiles.size * 2
                            + N_FFT * N_FFT * 2
                            + B * F_PAD * nf_pad * np.dtype(out_dtype).itemsize)),
    )(tiles, w)

    # drop the 7 junk frequency rows and the frame padding; already (B, freq, frames)
    return out[:, :N_FREQ, :n_frames]


def _reference(signal):
    """Pure-JAX reference (f32 rfft) for correctness checking."""
    sig = jnp.squeeze(signal)
    if sig.ndim == 1:
        sig = sig[None, :]
    B, L = sig.shape
    padded = jnp.pad(sig, ((0, 0), (N_FFT // 2, N_FFT // 2)), mode="reflect")
    n_frames = 1 + L // HOP
    idx = jnp.arange(n_frames)[:, None] * HOP + jnp.arange(N_FFT)[None, :]
    frames = padded[:, idx]                                   # (B, n_frames, 256)
    window = 0.5 * (1.0 - jnp.cos(2.0 * jnp.pi * jnp.arange(N_FFT) / N_FFT))
    spec = jnp.abs(jnp.fft.rfft(frames * window[None, None, :], axis=-1))
    return jnp.transpose(jnp.log10(spec + 1e-9), (0, 2, 1))   # (B, 129, n_frames)


if __name__ == "__main__":
    def _check(B, L, key):
        signal = jax.random.normal(key, (B, 1, L), dtype=jnp.float32)
        out = jax.block_until_ready(st_layer(signal))
        n_frames = 1 + L // HOP
        assert out.shape == (B, N_FREQ, n_frames), out.shape
        ref = np.asarray(_reference(signal), np.float64)
        res = np.asarray(out, np.float64)
        # bf16 matmul introduces a small *absolute* error on |X|; check magnitudes
        # everywhere, and the log-spectrogram itself on bins well above that floor.
        np.testing.assert_allclose(10.0 ** res, 10.0 ** ref, rtol=2e-2, atol=0.15)
        mask = (10.0 ** ref) > 2.0
        assert mask.mean() > 0.5
        np.testing.assert_allclose(res[mask], ref[mask], rtol=0.0, atol=5e-2)

    k1, k2 = jax.random.split(jax.random.PRNGKey(0))
    _check(2, 1024, k1)     # B=2, L=1024 -> (2, 129, 9)
    _check(1, 1000, k2)     # non-multiple-of-hop length / squeezed batch path
    # TODO(synk): the torch module only prints log_spectrogram.size() and returns
    # None; we return the log-spectrogram instead of reproducing the print.
    print("KERNEL_OK")
</pallas_src>

<mosaic_0001>
module attributes {stable_mosaic.version = 11 : i64} {
  func.func @_stft_kernel(%arg0: i32, %arg1: i32, %arg2: memref<1x1x257x128xbf16, #tpu.memory_space<vmem>>, %arg3: memref<256x256xbf16, #tpu.memory_space<vmem>>, %arg4: memref<1x136x256xf32, #tpu.memory_space<vmem>>) attributes {dimension_semantics = [#tpu.dimension_semantics<parallel>, #tpu.dimension_semantics<parallel>], iteration_bounds = array<i64: 2, 1>, scalar_prefetch = 0 : i64, scratch_operands = 0 : i64, tpu.core_type = #tpu.core_type<tc>, window_params = [{transform_indices = @transform_0, window_bounds = array<i64: 1, 1, 257, 128>}, {pipeline_mode = #tpu.pipeline_mode<synchronous>, transform_indices = @transform_1, window_bounds = array<i64: 256, 256>}, {transform_indices = @transform_2, window_bounds = array<i64: 1, 136, 256>}]} {
    %c0 = arith.constant 0 : index
    %c0_0 = arith.constant 0 : index
    %c0_1 = arith.constant 0 : index
    %c0_2 = arith.constant 0 : index
    %0 = vector.load %arg2[%c0, %c0_0, %c0_1, %c0_2] : memref<1x1x257x128xbf16, #tpu.memory_space<vmem>>, vector<1x1x257x128xbf16>
    %1 = vector.shape_cast %0 : vector<1x1x257x128xbf16> to vector<257x128xbf16>
    %c0_3 = arith.constant 0 : index
    %c0_4 = arith.constant 0 : index
    %2 = vector.load %arg3[%c0_3, %c0_4] : memref<256x256xbf16, #tpu.memory_space<vmem>>, vector<128x256xbf16>
    %cst = arith.constant dense<0.000000e+00> : vector<257x256xf32>
    %3 = tpu.matmul %1, %2, %cst {dimension_numbers = #tpu.dot_dimension_numbers<[1], [0], [0], [1], [0, 0, 1, 1], [], []>} : vector<257x128xbf16>, vector<128x256xbf16>, vector<257x256xf32> -> vector<257x256xf32>
    %c128 = arith.constant 128 : index
    %c0_5 = arith.constant 0 : index
    %4 = vector.load %arg3[%c128, %c0_5] : memref<256x256xbf16, #tpu.memory_space<vmem>>, vector<128x256xbf16>
    %cst_6 = arith.constant dense<0.000000e+00> : vector<257x256xf32>
    %5 = tpu.matmul %1, %4, %cst_6 {dimension_numbers = #tpu.dot_dimension_numbers<[1], [0], [0], [1], [0, 0, 1, 1], [], []>} : vector<257x128xbf16>, vector<128x256xbf16>, vector<257x256xf32> -> vector<257x256xf32>
    %6 = vector.extract_strided_slice %3 {offsets = [0, 0], sizes = [256, 256], strides = [1, 1]} : vector<257x256xf32> to vector<256x256xf32>
    %7 = vector.extract_strided_slice %5 {offsets = [1, 0], sizes = [256, 256], strides = [1, 1]} : vector<257x256xf32> to vector<256x256xf32>
    %8 = arith.addf %6, %7 : vector<256x256xf32>
    %9 = tpu.transpose %8, [1, 0] : vector<256x256xf32> -> vector<256x256xf32>
    %10 = vector.extract_strided_slice %9 {offsets = [0, 0], sizes = [128, 256], strides = [1, 1]} : vector<256x256xf32> to vector<128x256xf32>
    %11 = vector.extract_strided_slice %9 {offsets = [128, 0], sizes = [128, 256], strides = [1, 1]} : vector<256x256xf32> to vector<128x256xf32>
    %12 = tpu.iota {dimensions = array<i32: 0>} : vector<128x256xi32>
    %c0_i32 = arith.constant 0 : i32
    %13 = vector.broadcast %c0_i32 : i32 to vector<128x256xi32>
    %14 = arith.cmpi eq, %12, %13 : vector<128x256xi32>
    %cst_7 = arith.constant 0.000000e+00 : f32
    %15 = vector.broadcast %cst_7 : f32 to vector<128x256xf32>
    %16 = arith.select %14, %15, %11 : vector<128x256xi1>, vector<128x256xf32>
    %17 = arith.mulf %10, %10 : vector<128x256xf32>
    %18 = arith.mulf %16, %16 : vector<128x256xf32>
    %19 = arith.addf %17, %18 : vector<128x256xf32>
    %cst_8 = arith.constant 1.000000e-18 : f32
    %20 = vector.broadcast %cst_8 : f32 to vector<128x256xf32>
    %21 = arith.addf %19, %20 : vector<128x256xf32>
    %22 = math.log %21 : vector<128x256xf32>
    %cst_9 = arith.constant 0.434294492 : f32
    %23 = vector.broadcast %cst_9 : f32 to vector<128x256xf32>
    %24 = arith.mulf %22, %23 : vector<128x256xf32>
    %cst_10 = arith.constant 5.000000e-01 : f32
    %25 = vector.broadcast %cst_10 : f32 to vector<128x256xf32>
    %26 = arith.mulf %25, %24 : vector<128x256xf32>
    %c0_11 = arith.constant 0 : index
    %c0_12 = arith.constant 0 : index
    %c0_13 = arith.constant 0 : index
    %27 = vector.load %arg4[%c0_11, %c0_12, %c0_13] : memref<1x136x256xf32, #tpu.memory_space<vmem>>, vector<1x128x256xf32>
    %28 = vector.shape_cast %27 : vector<1x128x256xf32> to vector<128x256xf32>
    %29 = vector.shape_cast %26 : vector<128x256xf32> to vector<1x128x256xf32>
    tpu.vector_store %arg4[%c0_11, %c0_12, %c0_13], %29 {strides = array<i32>} : memref<1x136x256xf32, #tpu.memory_space<vmem>>, vector<1x128x256xf32>,
    %30 = vector.extract_strided_slice %11 {offsets = [0, 0], sizes = [8, 256], strides = [1, 1]} : vector<128x256xf32> to vector<8x256xf32>
    %31 = arith.mulf %30, %30 : vector<8x256xf32>
    %cst_14 = arith.constant 1.000000e-18 : f32
    %32 = vector.broadcast %cst_14 : f32 to vector<8x256xf32>
    %33 = arith.addf %31, %32 : vector<8x256xf32>
    %34 = math.log %33 : vector<8x256xf32>
    %cst_15 = arith.constant 0.434294492 : f32
    %35 = vector.broadcast %cst_15 : f32 to vector<8x256xf32>
    %36 = arith.mulf %34, %35 : vector<8x256xf32>
    %cst_16 = arith.constant 5.000000e-01 : f32
    %37 = vector.broadcast %cst_16 : f32 to vector<8x256xf32>
    %38 = arith.mulf %37, %36 : vector<8x256xf32>
    %c0_17 = arith.constant 0 : index
    %c128_18 = arith.constant 128 : index
    %c0_19 = arith.constant 0 : index
    %39 = vector.load %arg4[%c0_17, %c128_18, %c0_19] : memref<1x136x256xf32, #tpu.memory_space<vmem>>, vector<1x8x256xf32>
    %40 = vector.shape_cast %39 : vector<1x8x256xf32> to vector<8x256xf32>
    %41 = vector.shape_cast %38 : vector<8x256xf32> to vector<1x8x256xf32>
    tpu.vector_store %arg4[%c0_17, %c128_18, %c0_19], %41 {strides = array<i32>} : memref<1x136x256xf32, #tpu.memory_space<vmem>>, vector<1x8x256xf32>,
    return
  }
  func.func @transform_0(%arg0: i32, %arg1: i32) -> (i32, i32, i32, i32) {
    %c0_i32 = arith.constant 0 : i32
    %c0_i32_0 = arith.constant 0 : i32
    %c0_i32_1 = arith.constant 0 : i32
    return %arg0, %arg1, %c0_i32, %c0_i32_0 : i32, i32, i32, i32
  }
  func.func @transform_1(%arg0: i32, %arg1: i32) -> (i32, i32) {
    %c0_i32 = arith.constant 0 : i32
    %c0_i32_0 = arith.constant 0 : i32
    %c0_i32_1 = arith.constant 0 : i32
    return %c0_i32, %c0_i32_0 : i32, i32
  }
  func.func @transform_2(%arg0: i32, %arg1: i32) -> (i32, i32, i32) {
    %c0_i32 = arith.constant 0 : i32
    %c0_i32_0 = arith.constant 0 : i32
    return %arg0, %c0_i32, %arg1 : i32, i32, i32
  }
}

</mosaic_0001>

<llo_original>
// kernel: tpu_custom_call.1
$region0: #{tpu_custom_call.1}
  #allocation0 [shape = 'u32[]', space=smem, size = 0x4, offset = 0x4, fixed_abs, tag = 'smem constant byte address 0x4 - core index']
  #allocation1 [shape = 'u32[144,128]{1,0:T(1,128)}', space=vmem, size = 0x12000, scoped, tag = 'internal scratch']
  %s0 = inlined_call_operand.vmem [shape: bf16[2,1,257,128], index: 0, kind: input, shape index: {}]
  %s1 = inlined_call_operand.vmem [shape: bf16[256,256], index: 1, kind: input, shape index: {}]
  %s2 = inlined_call_operand.hbm [shape: f32[2,136,256], index: 2, kind: output, shape index: {}]
  %s3 = sld [smem:[#allocation0]]
  $region41: #{tpu_custom_call.1} parent=0
    _
  %s5 = ssub.s32 1, %s3
  %s6 = scalar_select 0, %s5, %s3
  $region1: #{tpu_custom_call.1} parent=0
    #allocation2 [shape = 'u8[278528]{0}', space=vmem, size = 0x44000, scoped, tag = 'output window, operand 0']
    #allocation3 [shape = 's32[2]{0}', space=sflag, size = 0x8, scoped, tag = 'scoped memory for tpu_custom_call.1']
    %7 = vsyncpa [#allocation3], 0
    %s8 = scalar_lea.sflag [#allocation3], 1
    %9 = vsyncpa %s8, 0
    loop: start=0, step=1, limit=4
    $region2: #{tpu_custom_call.1} parent=1 // loop_pre_header
      _
    $region3: #{tpu_custom_call.1} parent=1 // loop_header
      %s11 = sphi 0, %s15
      %p12 = scmp.ge.s32.totalorder %s11, 4
      %s18 = sphi 0, %s30
      %s19 = sphi 0, %s26
      %s20 = sphi 0, %s18
      %s21 = sphi 0, %s19
      %s22 = sphi 0, %s20
      %s23 = sphi 0, %s21
      %s35 = sphi 0, %s37
      %s38 = sphi 0, %s35
      %s39 = sphi 0, %s38
      %s55 = sphi 0, %s39
      %s59 = sphi 0, %s59
      %s61 = sphi 0, %s59
      %s62 = sphi 0, %s61
      %s76 = sphi 0, %s62
      %s84 = sphi 0, %s86
      %s87 = sphi 0, %s84
      %s88 = sphi 0, %s87
      %s104 = sphi 0, %s88
    $region4: #{tpu_custom_call.1} parent=1 // loop_header_branch
      %14 = sbr.rel (%p12) target = $region8
    $region5: #{tpu_custom_call.1} parent=1 // loop_body
      %s16 = ssub.s32 %s11, 1
      %s17 = ssub.s32 %s11, 2
      %s24 = sadd.s32 1, %s19
      %p25 = scmp.ge.s32.totalorder %s24, 1
      %s26 = scalar_select %p25, 0, %s24
      %s27 = sadd.s32 1, %s18
      %s28 = scalar_select %p25, %s27, %s18
      %p29 = scmp.ge.s32.totalorder %s28, 2
      %s30 = scalar_select %p29, 0, %s28
      %s31 = ssub.s32 %s18, %s30
      %s32 = ssub.s32 %s19, %s26
      %s33 = sor.u32 %s31, %s32
      %p34 = scmp.eq.s32.totalorder %s33, 0
      %s36 = sadd.s32 %s35, 1
      %s37 = scalar_select %p34, %s35, %s36
      %p40 = pneg %p34
      %p41 = scmp.eq.s32.totalorder %s11, 1
      %p42 = por %p40, %p41
      %p43 = scmp.ne.s32.totalorder %s35, %s38
      %p44 = scmp.eq.s32.totalorder %s11, 0
      %p45 = por %p43, %p44
      %p46 = scmp.ne.s32.totalorder %s35, %s38
      %p47 = scmp.eq.s32.totalorder %s16, 1
      %p48 = por %p46, %p47
      %p49 = scmp.ne.s32.totalorder %s38, %s39
      %p50 = scmp.eq.s32.totalorder %s16, 0
      %p51 = por %p49, %p50
      %p52 = scmp.ne.s32.totalorder %s38, %s39
      %p53 = scmp.eq.s32.totalorder %s17, 1
      %p54 = por %p52, %p53
      %p56 = scmp.ne.s32.totalorder %s39, %s55
      %p57 = scmp.eq.s32.totalorder %s17, 0
      %p58 = por %p56, %p57
      %s60 = sadd.s32 %s59, 1
      %p63 = scmp.eq.s32.totalorder %s11, 1
      %p64 = scmp.ne.s32.totalorder %s59, %s61
      %p65 = scmp.eq.s32.totalorder %s11, 0
      %p66 = por %p64, %p65
      %p67 = scmp.ne.s32.totalorder %s59, %s61
      %p68 = scmp.eq.s32.totalorder %s16, 1
      %p69 = por %p67, %p68
      %p70 = scmp.ne.s32.totalorder %s61, %s62
      %p71 = scmp.eq.s32.totalorder %s16, 0
      %p72 = por %p70, %p71
      %p73 = scmp.ne.s32.totalorder %s61, %s62
      %p74 = scmp.eq.s32.totalorder %s17, 1
      %p75 = por %p73, %p74
      %p77 = scmp.ne.s32.totalorder %s62, %s76
      %p78 = scmp.eq.s32.totalorder %s17, 0
      %p79 = por %p77, %p78
      %s80 = ssub.s32 %s18, %s30
      %s81 = ssub.s32 %s19, %s26
      %s82 = sor.u32 %s80, %s81
      %p83 = scmp.eq.s32.totalorder %s82, 0
      %s85 = sadd.s32 %s84, 1
      %s86 = scalar_select %p83, %s84, %s85
      %p89 = pneg %p83
      %p90 = scmp.eq.s32.totalorder %s11, 1
      %p91 = por %p89, %p90
      %p92 = scmp.ne.s32.totalorder %s84, %s87
      %p93 = scmp.eq.s32.totalorder %s11, 0
      %p94 = por %p92, %p93
      %p95 = scmp.ne.s32.totalorder %s84, %s87
      %p96 = scmp.eq.s32.totalorder %s16, 1
      %p97 = por %p95, %p96
      %p98 = scmp.ne.s32.totalorder %s87, %s88
      %p99 = scmp.eq.s32.totalorder %s16, 0
      %p100 = por %p98, %p99
      %p101 = scmp.ne.s32.totalorder %s87, %s88
      %p102 = scmp.eq.s32.totalorder %s17, 1
      %p103 = por %p101, %p102
      %p105 = scmp.ne.s32.totalorder %s88, %s104
      %p106 = scmp.eq.s32.totalorder %s17, 0
      %p107 = por %p105, %p106
      %p108 = scmp.le.s32.totalorder 1, %s11
      %p109 = scmp.lt.s32.totalorder %s11, 3
      %p110 = pnand %p108, %p109
      %p111 = pneg %p110
      // Predicated region
      $region9: #{tpu_custom_call.1} parent=5 // pred_check
        _
      $region10: #{tpu_custom_call.1} parent=5 // pred_check_branch
        %113 = sbr.rel (%p110) target = $region12
      $region11: #{tpu_custom_call.1} parent=5 // pred_region
        %s114 = ssub.s32 %s11, 1
        // Predicated region
        $region13: #{tpu_custom_call.1} parent=11 // pred_check
          %p115 = pneg %p72
        $region14: #{tpu_custom_call.1} parent=11 // pred_check_branch
          %117 = sbr.rel (%p115) target = $region16
        $region15: #{tpu_custom_call.1} parent=11 // pred_region
          _
        $region16: #{tpu_custom_call.1} parent=11 // pred_fallthru
          _
      $region12: #{tpu_custom_call.1} parent=5 // pred_fallthru
        _
      %p118 = scmp.lt.s32.totalorder %s11, 2
      // Predicated region
      $region17: #{tpu_custom_call.1} parent=5 // pred_check
        %p119 = pneg %p118
      $region18: #{tpu_custom_call.1} parent=5 // pred_check_branch
        %121 = sbr.rel (%p119) target = $region20
      $region19: #{tpu_custom_call.1} parent=5 // pred_region
        // Predicated region
        $region21: #{tpu_custom_call.1} parent=19 // pred_check
          %p122 = pneg %p45
        $region22: #{tpu_custom_call.1} parent=19 // pred_check_branch
          %124 = sbr.rel (%p122) target = $region24
        $region23: #{tpu_custom_call.1} parent=19 // pred_region
          %p125 = scmp.lt.s32.totalorder %s18, 1
          %s126 = scalar_select %p125, %s18, 1
          %p127 = scmp.lt.s32.totalorder %s19, 0
          %s128 = scalar_select %p127, %s19, 0
          %s129 = smul.addr %s128, 33
          %s130 = smul.addr %s126, 33
          %s131 = sadd.s32 %s129, %s130
          %s132 = smul.addr %s131, 4
          %s133 = scalar_lea.vmem %s0, %s132
        $region24: #{tpu_custom_call.1} parent=19 // pred_fallthru
          _
      $region20: #{tpu_custom_call.1} parent=5 // pred_fallthru
        _
      %p134 = scmp.le.s32.totalorder 1, %s11
      %p135 = scmp.lt.s32.totalorder %s11, 3
      %p136 = pnand %p134, %p135
      %p137 = pneg %p136
      // Predicated region
      $region25: #{tpu_custom_call.1} parent=5 // pred_check
        _
      $region26: #{tpu_custom_call.1} parent=5 // pred_check_branch
        %139 = sbr.rel (%p136) target = $region28
      $region27: #{tpu_custom_call.1} parent=5 // pred_region
        %s140 = ssub.s32 %s11, 1
        %p141 = scmp.lt.s32.totalorder %s20, 1
        %s142 = scalar_select %p141, %s20, 1
        %p143 = scmp.lt.s32.totalorder %s21, 0
        %s144 = scalar_select %p143, %s21, 0
        %s145 = smul.addr %s144, 33
        %s146 = smul.addr %s142, 33
        %s147 = sadd.s32 %s145, %s146
        %s148 = smul.addr %s147, 4
        %s149 = scalar_lea.vmem %s0, %s148
        %p150 = pneg %p51
        %p151 = pneg %p48
        %p152 = pneg %p72
        %p153 = pneg %p69
        %p154 = pneg %p100
        %p155 = pneg %p97
        %s156 = sand.u32 %s87, 1
        %s157 = scalar_lea.sflag [#allocation3], %s156
        %s158 = sand.u32 %s87, 1
        %s159 = smul.addr %s158, 272
        %s160 = scalar_lea.vmem [#allocation2], %s159
        %p161 = scmp.lt.s32.totalorder %s20, 1
        %s162 = scalar_select %p161, %s20, 1
        %p163 = scmp.lt.s32.totalorder %s21, 0
        %s164 = scalar_select %p163, %s21, 0
        %s165 = smul.addr %s164, 33
        %s166 = smul.addr %s162, 33
        %s167 = sadd.s32 %s165, %s166
        %s168 = smul.addr %s167, 4
        %s169 = scalar_lea.vmem %s0, %s168
        %s170 = smul.u32 2, %s21
        %v172 = vld [vmem:[%s169] sm:$0xf]
        %v173 = vld [vmem:[%s169 + $0x4] sm:$0xf]
        %v174 = vld [vmem:[%s169 + $0x8] sm:$0xf]
        %v175 = vld [vmem:[%s169 + $0xc] sm:$0xf]
        %v176 = vld [vmem:[%s169 + $0x10] sm:$0xf]
        %v177 = vld [vmem:[%s169 + $0x14] sm:$0xf]
        %v178 = vld [vmem:[%s169 + $0x18] sm:$0xf]
        %v179 = vld [vmem:[%s169 + $0x1c] sm:$0xf]
        %v180 = vld [vmem:[%s169 + $0x20] sm:$0xf]
        %v181 = vld [vmem:[%s169 + $0x24] sm:$0xf]
        %v182 = vld [vmem:[%s169 + $0x28] sm:$0xf]
        %v183 = vld [vmem:[%s169 + $0x2c] sm:$0xf]
        %v184 = vld [vmem:[%s169 + $0x30] sm:$0xf]
        %v185 = vld [vmem:[%s169 + $0x34] sm:$0xf]
        %v186 = vld [vmem:[%s169 + $0x38] sm:$0xf]
        %v187 = vld [vmem:[%s169 + $0x3c] sm:$0xf]
        %v188 = vld [vmem:[%s169 + $0x40] sm:$0xf]
        %v189 = vld [vmem:[%s169 + $0x44] sm:$0xf]
        %v190 = vld [vmem:[%s169 + $0x48] sm:$0xf]
        %v191 = vld [vmem:[%s169 + $0x4c] sm:$0xf]
        %v192 = vld [vmem:[%s169 + $0x50] sm:$0xf]
        %v193 = vld [vmem:[%s169 + $0x54] sm:$0xf]
        %v194 = vld [vmem:[%s169 + $0x58] sm:$0xf]
        %v195 = vld [vmem:[%s169 + $0x5c] sm:$0xf]
        %v196 = vld [vmem:[%s169 + $0x60] sm:$0xf]
        %v197 = vld [vmem:[%s169 + $0x64] sm:$0xf]
        %v198 = vld [vmem:[%s169 + $0x68] sm:$0xf]
        %v199 = vld [vmem:[%s169 + $0x6c] sm:$0xf]
        %v200 = vld [vmem:[%s169 + $0x70] sm:$0xf]
        %v201 = vld [vmem:[%s169 + $0x74] sm:$0xf]
        %v202 = vld [vmem:[%s169 + $0x78] sm:$0xf]
        %v203 = vld [vmem:[%s169 + $0x7c] sm:$0xf]
        %v204 = vld [vmem:[%s169 + $0x80] sm:$0x1]
        %v205 = vld [vmem:[%s1] sm:$0xff]
        %v206 = vld [vmem:[%s1 + $0x8] sm:$0xff]
        %v207 = vld [vmem:[%s1 + $0x10] sm:$0xff]
        %v208 = vld [vmem:[%s1 + $0x18] sm:$0xff]
        %v209 = vld [vmem:[%s1 + $0x20] sm:$0xff]
        %v210 = vld [vmem:[%s1 + $0x28] sm:$0xff]
        %v211 = vld [vmem:[%s1 + $0x30] sm:$0xff]
        %v212 = vld [vmem:[%s1 + $0x38] sm:$0xff]
        %v213 = vld [vmem:[%s1 + $0x40] sm:$0xff]
        %v214 = vld [vmem:[%s1 + $0x48] sm:$0xff]
        %v215 = vld [vmem:[%s1 + $0x50] sm:$0xff]
        %v216 = vld [vmem:[%s1 + $0x58] sm:$0xff]
        %v217 = vld [vmem:[%s1 + $0x60] sm:$0xff]
        %v218 = vld [vmem:[%s1 + $0x68] sm:$0xff]
        %v219 = vld [vmem:[%s1 + $0x70] sm:$0xff]
        %v220 = vld [vmem:[%s1 + $0x78] sm:$0xff]
        %v254 = vunpack.c.l.b16 %v172
        %v255 = vunpack.c.l.b16 %v173
        %v256 = vunpack.c.l.b16 %v174
        %v257 = vunpack.c.l.b16 %v175
        %v258 = vunpack.c.l.b16 %v176
        %v259 = vunpack.c.l.b16 %v177
        %v260 = vunpack.c.l.b16 %v178
        %v261 = vunpack.c.l.b16 %v179
        %v262 = vunpack.c.l.b16 %v180
        %v263 = vunpack.c.l.b16 %v181
        %v264 = vunpack.c.l.b16 %v182
        %v265 = vunpack.c.l.b16 %v183
        %v266 = vunpack.c.l.b16 %v184
        %v267 = vunpack.c.l.b16 %v185
        %v268 = vunpack.c.l.b16 %v186
        %v269 = vunpack.c.l.b16 %v187
        %v270 = vunpack.c.l.b16 %v188
        %v271 = vunpack.c.l.b16 %v189
        %v272 = vunpack.c.l.b16 %v190
        %v273 = vunpack.c.l.b16 %v191
        %v274 = vunpack.c.l.b16 %v192
        %v275 = vunpack.c.l.b16 %v193
        %v276 = vunpack.c.l.b16 %v194
        %v277 = vunpack.c.l.b16 %v195
        %v278 = vunpack.c.l.b16 %v196
        %v279 = vunpack.c.l.b16 %v197
        %v280 = vunpack.c.l.b16 %v198
        %v281 = vunpack.c.l.b16 %v199
        %v282 = vunpack.c.l.b16 %v200
        %v283 = vunpack.c.l.b16 %v201
        %v284 = vunpack.c.l.b16 %v202
        %v285 = vunpack.c.l.b16 %v203
        %v286 = vunpack.c.l.b16 %v204
        %v287 = vpack.c.b16 %v255, %v254
        %v288 = vpack.c.b16 %v257, %v256
        %v289 = vpack.c.b16 %v259, %v258
        %v290 = vpack.c.b16 %v261, %v260
        %v291 = vpack.c.b16 %v263, %v262
        %v292 = vpack.c.b16 %v265, %v264
        %v293 = vpack.c.b16 %v267, %v266
        %v294 = vpack.c.b16 %v269, %v268
        %v295 = vpack.c.b16 %v271, %v270
        %v296 = vpack.c.b16 %v273, %v272
        %v297 = vpack.c.b16 %v275, %v274
        %v298 = vpack.c.b16 %v277, %v276
        %v299 = vpack.c.b16 %v279, %v278
        %v300 = vpack.c.b16 %v281, %v280
        %v301 = vpack.c.b16 %v283, %v282
        %v302 = vpack.c.b16 %v285, %v284
        %v303 = vpack.c.b16 %v286, %v286
        %v337 = vunpack.c.l.b16 %v205
        %v338 = vunpack.c.h.b16 %v205
        %v339 = vunpack.c.l.b16 %v206
        %v340 = vunpack.c.h.b16 %v206
        %v341 = vunpack.c.l.b16 %v207
        %v342 = vunpack.c.h.b16 %v207
        %v343 = vunpack.c.l.b16 %v208
        %v344 = vunpack.c.h.b16 %v208
        %v345 = vunpack.c.l.b16 %v209
        %v346 = vunpack.c.h.b16 %v209
        %v347 = vunpack.c.l.b16 %v210
        %v348 = vunpack.c.h.b16 %v210
        %v349 = vunpack.c.l.b16 %v211
        %v350 = vunpack.c.h.b16 %v211
        %v351 = vunpack.c.l.b16 %v212
        %v352 = vunpack.c.h.b16 %v212
        %v353 = vunpack.c.l.b16 %v213
        %v354 = vunpack.c.h.b16 %v213
        %v355 = vunpack.c.l.b16 %v214
        %v356 = vunpack.c.h.b16 %v214
        %v357 = vunpack.c.l.b16 %v215
        %v358 = vunpack.c.h.b16 %v215
        %v359 = vunpack.c.l.b16 %v216
        %v360 = vunpack.c.h.b16 %v216
        %v361 = vunpack.c.l.b16 %v217
        %v362 = vunpack.c.h.b16 %v217
        %v363 = vunpack.c.l.b16 %v218
        %v364 = vunpack.c.h.b16 %v218
        %v365 = vunpack.c.l.b16 %v219
        %v366 = vunpack.c.h.b16 %v219
        %v367 = vunpack.c.l.b16 %v220
        %v368 = vunpack.c.h.b16 %v220
        %v369 = vpack.c.b16 %v339, %v337
        %v370 = vpack.c.b16 %v340, %v338
        %v371 = vpack.c.b16 %v343, %v341
        %v372 = vpack.c.b16 %v344, %v342
        %v373 = vpack.c.b16 %v347, %v345
        %v374 = vpack.c.b16 %v348, %v346
        %v375 = vpack.c.b16 %v351, %v349
        %v376 = vpack.c.b16 %v352, %v350
        %v377 = vpack.c.b16 %v355, %v353
        %v378 = vpack.c.b16 %v356, %v354
        %v379 = vpack.c.b16 %v359, %v357
        %v380 = vpack.c.b16 %v360, %v358
        %v381 = vpack.c.b16 %v363, %v361
        %v382 = vpack.c.b16 %v364, %v362
        %v383 = vpack.c.b16 %v367, %v365
        %v384 = vpack.c.b16 %v368, %v366
        %401 = vmatprep.subr.bf16.mxu0 %v384
        %402 = vmatpush1.bf16.msra.mxu0 %v383
        %403 = vmatprep.subr.bf16.mxu0 %v382
        %404 = vmatpush1.bf16.msra.mxu0 %v381
        %405 = vmatprep.subr.bf16.mxu0 %v380
        %406 = vmatpush1.bf16.msra.mxu0 %v379
        %407 = vmatprep.subr.bf16.mxu0 %v378
        %408 = vmatpush1.bf16.msra.mxu0 %v377
        %409 = vmatprep.subr.bf16.mxu0 %v376
        %410 = vmatpush1.bf16.msra.mxu0 %v375
        %411 = vmatprep.subr.bf16.mxu0 %v374
        %412 = vmatpush1.bf16.msra.mxu0 %v373
        %413 = vmatprep.subr.bf16.mxu0 %v372
        %414 = vmatpush1.bf16.msra.mxu0 %v371
        %415 = vmatprep.subr.bf16.mxu0 %v370
        %416 = vmatpush1.bf16.msra.mxu0 %v369
        %417 = vmatprep.subr.bf16.mxu0 0
        %418 = vmatpush2.bf16.msra.mxu0 0
        %419 = vmatprep.subr.bf16.mxu0 0
        %420 = vmatpush2.bf16.msra.mxu0 0
        %421 = vmatprep.subr.bf16.mxu0 0
        %422 = vmatpush2.bf16.msra.mxu0 0
        %423 = vmatprep.subr.bf16.mxu0 0
        %424 = vmatpush2.bf16.msra.mxu0 0
        %425 = vmatprep.subr.bf16.mxu0 0
        %426 = vmatpush2.bf16.msra.mxu0 0
        %427 = vmatprep.subr.bf16.mxu0 0
        %428 = vmatpush2.bf16.msra.mxu0 0
        %429 = vmatprep.subr.bf16.mxu0 0
        %430 = vmatpush2.bf16.msra.mxu0 0
        %431 = vmatprep.subr.bf16.mxu0 0
        %432 = vmatpush2.bf16.msra.mxu0 0
        %433 = vmatprep.mubr.bf16.mxu0 0
        %434 = vmatmul.mubr.bf16.gmra.mxu0 %v287
        %v435 = vpop.f32.mrf.mxu0
        %v436 = vadd.f32 0.0, %v435
        %v437 = vpop.f32.mrf.mxu0
        %v438 = vadd.f32 0.0, %v437
        %v439 = vpop.f32.mrf.mxu0
        %v440 = vadd.f32 0.0, %v439
        %v441 = vpop.f32.mrf.mxu0
        %v442 = vadd.f32 0.0, %v441
        %443 = vmatprep.mubr.bf16.mxu0 0
        %444 = vmatmul.mubr.bf16.gmra.mxu0 %v288
        %v445 = vpop.f32.mrf.mxu0
        %v446 = vadd.f32 0.0, %v445
        %v447 = vpop.f32.mrf.mxu0
        %v448 = vadd.f32 0.0, %v447
        %v449 = vpop.f32.mrf.mxu0
        %v450 = vadd.f32 0.0, %v449
        %v451 = vpop.f32.mrf.mxu0
        %v452 = vadd.f32 0.0, %v451
        %453 = vmatprep.mubr.bf16.mxu0 0
        %454 = vmatmul.mubr.bf16.gmra.mxu0 %v289
        %v455 = vpop.f32.mrf.mxu0
        %v456 = vadd.f32 0.0, %v455
        %v457 = vpop.f32.mrf.mxu0
        %v458 = vadd.f32 0.0, %v457
        %v459 = vpop.f32.mrf.mxu0
        %v460 = vadd.f32 0.0, %v459
        %v461 = vpop.f32.mrf.mxu0
        %v462 = vadd.f32 0.0, %v461
        %463 = vmatprep.mubr.bf16.mxu0 0
        %464 = vmatmul.mubr.bf16.gmra.mxu0 %v290
        %v465 = vpop.f32.mrf.mxu0
        %v466 = vadd.f32 0.0, %v465
        %v467 = vpop.f32.mrf.mxu0
        %v468 = vadd.f32 0.0, %v467
        %v469 = vpop.f32.mrf.mxu0
        %v470 = vadd.f32 0.0, %v469
        %v471 = vpop.f32.mrf.mxu0
        %v472 = vadd.f32 0.0, %v471
        %473 = vmatprep.mubr.bf16.mxu0 0
        %474 = vmatmul.mubr.bf16.gmra.mxu0 %v291
        %v475 = vpop.f32.mrf.mxu0
        %v476 = vadd.f32 0.0, %v475
        %v477 = vpop.f32.mrf.mxu0
        %v478 = vadd.f32 0.0, %v477
        %v479 = vpop.f32.mrf.mxu0
        %v480 = vadd.f32 0.0, %v479
        %v481 = vpop.f32.mrf.mxu0
        %v482 = vadd.f32 0.0, %v481
        %483 = vmatprep.mubr.bf16.mxu0 0
        %484 = vmatmul.mubr.bf16.gmra.mxu0 %v292
        %v485 = vpop.f32.mrf.mxu0
        %v486 = vadd.f32 0.0, %v485
        %v487 = vpop.f32.mrf.mxu0
        %v488 = vadd.f32 0.0, %v487
        %v489 = vpop.f32.mrf.mxu0
        %v490 = vadd.f32 0.0, %v489
        %v491 = vpop.f32.mrf.mxu0
        %v492 = vadd.f32 0.0, %v491
        %493 = vmatprep.mubr.bf16.mxu0 0
        %494 = vmatmul.mubr.bf16.gmra.mxu0 %v293
        %v495 = vpop.f32.mrf.mxu0
        %v496 = vadd.f32 0.0, %v495
        %v497 = vpop.f32.mrf.mxu0
        %v498 = vadd.f32 0.0, %v497
        %v499 = vpop.f32.mrf.mxu0
        %v500 = vadd.f32 0.0, %v499
        %v501 = vpop.f32.mrf.mxu0
        %v502 = vadd.f32 0.0, %v501
        %503 = vmatprep.mubr.bf16.mxu0 0
        %504 = vmatmul.mubr.bf16.gmra.mxu0 %v294
        %v505 = vpop.f32.mrf.mxu0
        %v506 = vadd.f32 0.0, %v505
        %v507 = vpop.f32.mrf.mxu0
        %v508 = vadd.f32 0.0, %v507
        %v509 = vpop.f32.mrf.mxu0
        %v510 = vadd.f32 0.0, %v509
        %v511 = vpop.f32.mrf.mxu0
        %v512 = vadd.f32 0.0, %v511
        %513 = vmatprep.mubr.bf16.mxu0 0
        %514 = vmatmul.mubr.bf16.gmra.mxu0 %v295
        %v515 = vpop.f32.mrf.mxu0
        %v516 = vadd.f32 0.0, %v515
        %v517 = vpop.f32.mrf.mxu0
        %v518 = vadd.f32 0.0, %v517
        %v519 = vpop.f32.mrf.mxu0
        %v520 = vadd.f32 0.0, %v519
        %v521 = vpop.f32.mrf.mxu0
        %v522 = vadd.f32 0.0, %v521
        %523 = vmatprep.mubr.bf16.mxu0 0
        %524 = vmatmul.mubr.bf16.gmra.mxu0 %v296
        %v525 = vpop.f32.mrf.mxu0
        %v526 = vadd.f32 0.0, %v525
        %v527 = vpop.f32.mrf.mxu0
        %v528 = vadd.f32 0.0, %v527
        %v529 = vpop.f32.mrf.mxu0
        %v530 = vadd.f32 0.0, %v529
        %v531 = vpop.f32.mrf.mxu0
        %v532 = vadd.f32 0.0, %v531
        %533 = vmatprep.mubr.bf16.mxu0 0
        %534 = vmatmul.mubr.bf16.gmra.mxu0 %v297
        %v535 = vpop.f32.mrf.mxu0
        %v536 = vadd.f32 0.0, %v535
        %v537 = vpop.f32.mrf.mxu0
        %v538 = vadd.f32 0.0, %v537
        %v539 = vpop.f32.mrf.mxu0
        %v540 = vadd.f32 0.0, %v539
        %v541 = vpop.f32.mrf.mxu0
        %v542 = vadd.f32 0.0, %v541
        %543 = vmatprep.mubr.bf16.mxu0 0
        %544 = vmatmul.mubr.bf16.gmra.mxu0 %v298
        %v545 = vpop.f32.mrf.mxu0
        %v546 = vadd.f32 0.0, %v545
        %v547 = vpop.f32.mrf.mxu0
        %v548 = vadd.f32 0.0, %v547
        %v549 = vpop.f32.mrf.mxu0
        %v550 = vadd.f32 0.0, %v549
        %v551 = vpop.f32.mrf.mxu0
        %v552 = vadd.f32 0.0, %v551
        %553 = vmatprep.mubr.bf16.mxu0 0
        %554 = vmatmul.mubr.bf16.gmra.mxu0 %v299
        %v555 = vpop.f32.mrf.mxu0
        %v556 = vadd.f32 0.0, %v555
        %v557 = vpop.f32.mrf.mxu0
        %v558 = vadd.f32 0.0, %v557
        %v559 = vpop.f32.mrf.mxu0
        %v560 = vadd.f32 0.0, %v559
        %v561 = vpop.f32.mrf.mxu0
        %v562 = vadd.f32 0.0, %v561
        %563 = vmatprep.mubr.bf16.mxu0 0
        %564 = vmatmul.mubr.bf16.gmra.mxu0 %v300
        %v565 = vpop.f32.mrf.mxu0
        %v566 = vadd.f32 0.0, %v565
        %v567 = vpop.f32.mrf.mxu0
        %v568 = vadd.f32 0.0, %v567
        %v569 = vpop.f32.mrf.mxu0
        %v570 = vadd.f32 0.0, %v569
        %v571 = vpop.f32.mrf.mxu0
        %v572 = vadd.f32 0.0, %v571
        %573 = vmatprep.mubr.bf16.mxu0 0
        %574 = vmatmul.mubr.bf16.gmra.mxu0 %v301
        %v575 = vpop.f32.mrf.mxu0
        %v576 = vadd.f32 0.0, %v575
        %v577 = vpop.f32.mrf.mxu0
        %v578 = vadd.f32 0.0, %v577
        %v579 = vpop.f32.mrf.mxu0
        %v580 = vadd.f32 0.0, %v579
        %v581 = vpop.f32.mrf.mxu0
        %v582 = vadd.f32 0.0, %v581
        %583 = vmatprep.mubr.bf16.mxu0 0
        %584 = vmatmul.mubr.bf16.gmra.mxu0 %v302
        %v585 = vpop.f32.mrf.mxu0
        %v586 = vadd.f32 0.0, %v585
        %v587 = vpop.f32.mrf.mxu0
        %v588 = vadd.f32 0.0, %v587
        %v589 = vpop.f32.mrf.mxu0
        %v590 = vadd.f32 0.0, %v589
        %v591 = vpop.f32.mrf.mxu0
        %v592 = vadd.f32 0.0, %v591
        %593 = vmatprep.mubr.bf16.mxu0 0
        %594 = vmatmul.mubr.bf16.gmra.mxu0 %v303
        %v595 = vpop.f32.mrf.mxu0
        %v596 = vpop.f32.mrf.mxu0
        %v597 = vpop.f32.mrf.mxu0
        %v598 = vpop.f32.mrf.mxu0
        %599 = vdwg.mxu0
        %v600 = vld [vmem:[%s1 + $0x80] sm:$0xff]
        %v601 = vld [vmem:[%s1 + $0x88] sm:$0xff]
        %v602 = vld [vmem:[%s1 + $0x90] sm:$0xff]
        %v603 = vld [vmem:[%s1 + $0x98] sm:$0xff]
        %v604 = vld [vmem:[%s1 + $0xa0] sm:$0xff]
        %v605 = vld [vmem:[%s1 + $0xa8] sm:$0xff]
        %v606 = vld [vmem:[%s1 + $0xb0] sm:$0xff]
        %v607 = vld [vmem:[%s1 + $0xb8] sm:$0xff]
        %v608 = vld [vmem:[%s1 + $0xc0] sm:$0xff]
        %v609 = vld [vmem:[%s1 + $0xc8] sm:$0xff]
        %v610 = vld [vmem:[%s1 + $0xd0] sm:$0xff]
        %v611 = vld [vmem:[%s1 + $0xd8] sm:$0xff]
        %v612 = vld [vmem:[%s1 + $0xe0] sm:$0xff]
        %v613 = vld [vmem:[%s1 + $0xe8] sm:$0xff]
        %v614 = vld [vmem:[%s1 + $0xf0] sm:$0xff]
        %v615 = vld [vmem:[%s1 + $0xf8] sm:$0xff]
        %v632 = vunpack.c.l.b16 %v600
        %v633 = vunpack.c.h.b16 %v600
        %v634 = vunpack.c.l.b16 %v601
        %v635 = vunpack.c.h.b16 %v601
        %v636 = vunpack.c.l.b16 %v602
        %v637 = vunpack.c.h.b16 %v602
        %v638 = vunpack.c.l.b16 %v603
        %v639 = vunpack.c.h.b16 %v603
        %v640 = vunpack.c.l.b16 %v604
        %v641 = vunpack.c.h.b16 %v604
        %v642 = vunpack.c.l.b16 %v605
        %v643 = vunpack.c.h.b16 %v605
        %v644 = vunpack.c.l.b16 %v606
        %v645 = vunpack.c.h.b16 %v606
        %v646 = vunpack.c.l.b16 %v607
        %v647 = vunpack.c.h.b16 %v607
        %v648 = vunpack.c.l.b16 %v608
        %v649 = vunpack.c.h.b16 %v608
        %v650 = vunpack.c.l.b16 %v609
        %v651 = vunpack.c.h.b16 %v609
        %v652 = vunpack.c.l.b16 %v610
        %v653 = vunpack.c.h.b16 %v610
        %v654 = vunpack.c.l.b16 %v611
        %v655 = vunpack.c.h.b16 %v611
        %v656 = vunpack.c.l.b16 %v612
        %v657 = vunpack.c.h.b16 %v612
        %v658 = vunpack.c.l.b16 %v613
        %v659 = vunpack.c.h.b16 %v613
        %v660 = vunpack.c.l.b16 %v614
        %v661 = vunpack.c.h.b16 %v614
        %v662 = vunpack.c.l.b16 %v615
        %v663 = vunpack.c.h.b16 %v615
        %v664 = vpack.c.b16 %v634, %v632
        %v665 = vpack.c.b16 %v635, %v633
        %v666 = vpack.c.b16 %v638, %v636
        %v667 = vpack.c.b16 %v639, %v637
        %v668 = vpack.c.b16 %v642, %v640
        %v669 = vpack.c.b16 %v643, %v641
        %v670 = vpack.c.b16 %v646, %v644
        %v671 = vpack.c.b16 %v647, %v645
        %v672 = vpack.c.b16 %v650, %v648
        %v673 = vpack.c.b16 %v651, %v649
        %v674 = vpack.c.b16 %v654, %v652
        %v675 = vpack.c.b16 %v655, %v653
        %v676 = vpack.c.b16 %v658, %v656
        %v677 = vpack.c.b16 %v659, %v657
        %v678 = vpack.c.b16 %v662, %v660
        %v679 = vpack.c.b16 %v663, %v661
        %696 = vmatprep.subr.bf16.mxu0 %v679
        %697 = vmatpush1.bf16.msra.mxu0 %v678
        %698 = vmatprep.subr.bf16.mxu0 %v677
        %699 = vmatpush1.bf16.msra.mxu0 %v676
        %700 = vmatprep.subr.bf16.mxu0 %v675
        %701 = vmatpush1.bf16.msra.mxu0 %v674
        %702 = vmatprep.subr.bf16.mxu0 %v673
        %703 = vmatpush1.bf16.msra.mxu0 %v672
        %704 = vmatprep.subr.bf16.mxu0 %v671
        %705 = vmatpush1.bf16.msra.mxu0 %v670
        %706 = vmatprep.subr.bf16.mxu0 %v669
        %707 = vmatpush1.bf16.msra.mxu0 %v668
        %708 = vmatprep.subr.bf16.mxu0 %v667
        %709 = vmatpush1.bf16.msra.mxu0 %v666
        %710 = vmatprep.subr.bf16.mxu0 %v665
        %711 = vmatpush1.bf16.msra.mxu0 %v664
        %712 = vmatprep.subr.bf16.mxu0 0
        %713 = vmatpush2.bf16.msra.mxu0 0
        %714 = vmatprep.subr.bf16.mxu0 0
        %715 = vmatpush2.bf16.msra.mxu0 0
        %716 = vmatprep.subr.bf16.mxu0 0
        %717 = vmatpush2.bf16.msra.mxu0 0
        %718 = vmatprep.subr.bf16.mxu0 0
        %719 = vmatpush2.bf16.msra.mxu0 0
        %720 = vmatprep.subr.bf16.mxu0 0
        %721 = vmatpush2.bf16.msra.mxu0 0
        %722 = vmatprep.subr.bf16.mxu0 0
        %723 = vmatpush2.bf16.msra.mxu0 0
        %724 = vmatprep.subr.bf16.mxu0 0
        %725 = vmatpush2.bf16.msra.mxu0 0
        %726 = vmatprep.subr.bf16.mxu0 0
        %727 = vmatpush2.bf16.msra.mxu0 0
        %728 = vmatprep.mubr.bf16.mxu0 0
        %729 = vmatmul.mubr.bf16.gmra.mxu0 %v287
        %v730 = vpop.f32.mrf.mxu0
        %v731 = vadd.f32 0.0, %v730
        %v732 = vpop.f32.mrf.mxu0
        %v733 = vadd.f32 0.0, %v732
        %v734 = vpop.f32.mrf.mxu0
        %v735 = vadd.f32 0.0, %v734
        %v736 = vpop.f32.mrf.mxu0
        %v737 = vadd.f32 0.0, %v736
        %738 = vmatprep.mubr.bf16.mxu0 0
        %739 = vmatmul.mubr.bf16.gmra.mxu0 %v288
        %v740 = vpop.f32.mrf.mxu0
        %v741 = vadd.f32 0.0, %v740
        %v742 = vpop.f32.mrf.mxu0
        %v743 = vadd.f32 0.0, %v742
        %v744 = vpop.f32.mrf.mxu0
        %v745 = vadd.f32 0.0, %v744
        %v746 = vpop.f32.mrf.mxu0
        %v747 = vadd.f32 0.0, %v746
        %748 = vmatprep.mubr.bf16.mxu0 0
        %749 = vmatmul.mubr.bf16.gmra.mxu0 %v289
        %v750 = vpop.f32.mrf.mxu0
        %v751 = vadd.f32 0.0, %v750
        %v752 = vpop.f32.mrf.mxu0
        %v753 = vadd.f32 0.0, %v752
        %v754 = vpop.f32.mrf.mxu0
        %v755 = vadd.f32 0.0, %v754
        %v756 = vpop.f32.mrf.mxu0
        %v757 = vadd.f32 0.0, %v756
        %758 = vmatprep.mubr.bf16.mxu0 0
        %759 = vmatmul.mubr.bf16.gmra.mxu0 %v290
        %v760 = vpop.f32.mrf.mxu0
        %v761 = vadd.f32 0.0, %v760
        %v762 = vpop.f32.mrf.mxu0
        %v763 = vadd.f32 0.0, %v762
        %v764 = vpop.f32.mrf.mxu0
        %v765 = vadd.f32 0.0, %v764
        %v766 = vpop.f32.mrf.mxu0
        %v767 = vadd.f32 0.0, %v766
        %768 = vmatprep.mubr.bf16.mxu0 0
        %769 = vmatmul.mubr.bf16.gmra.mxu0 %v291
        %v770 = vpop.f32.mrf.mxu0
        %v771 = vadd.f32 0.0, %v770
        %v772 = vpop.f32.mrf.mxu0
        %v773 = vadd.f32 0.0, %v772
        %v774 = vpop.f32.mrf.mxu0
        %v775 = vadd.f32 0.0, %v774
        %v776 = vpop.f32.mrf.mxu0
        %v777 = vadd.f32 0.0, %v776
        %778 = vmatprep.mubr.bf16.mxu0 0
        %779 = vmatmul.mubr.bf16.gmra.mxu0 %v292
        %v780 = vpop.f32.mrf.mxu0
        %v781 = vadd.f32 0.0, %v780
        %v782 = vpop.f32.mrf.mxu0
        %v783 = vadd.f32 0.0, %v782
        %v784 = vpop.f32.mrf.mxu0
        %v785 = vadd.f32 0.0, %v784
        %v786 = vpop.f32.mrf.mxu0
        %v787 = vadd.f32 0.0, %v786
        %788 = vmatprep.mubr.bf16.mxu0 0
        %789 = vmatmul.mubr.bf16.gmra.mxu0 %v293
        %v790 = vpop.f32.mrf.mxu0
        %v791 = vadd.f32 0.0, %v790
        %v792 = vpop.f32.mrf.mxu0
        %v793 = vadd.f32 0.0, %v792
        %v794 = vpop.f32.mrf.mxu0
        %v795 = vadd.f32 0.0, %v794
        %v796 = vpop.f32.mrf.mxu0
        %v797 = vadd.f32 0.0, %v796
        %798 = vmatprep.mubr.bf16.mxu0 0
        %799 = vmatmul.mubr.bf16.gmra.mxu0 %v294
        %v800 = vpop.f32.mrf.mxu0
        %v801 = vadd.f32 0.0, %v800
        %v802 = vpop.f32.mrf.mxu0
        %v803 = vadd.f32 0.0, %v802
        %v804 = vpop.f32.mrf.mxu0
        %v805 = vadd.f32 0.0, %v804
        %v806 = vpop.f32.mrf.mxu0
        %v807 = vadd.f32 0.0, %v806
        %808 = vmatprep.mubr.bf16.mxu0 0
        %809 = vmatmul.mubr.bf16.gmra.mxu0 %v295
        %v810 = vpop.f32.mrf.mxu0
        %v811 = vadd.f32 0.0, %v810
        %v812 = vpop.f32.mrf.mxu0
        %v813 = vadd.f32 0.0, %v812
        %v814 = vpop.f32.mrf.mxu0
        %v815 = vadd.f32 0.0, %v814
        %v816 = vpop.f32.mrf.mxu0
        %v817 = vadd.f32 0.0, %v816
        %818 = vmatprep.mubr.bf16.mxu0 0
        %819 = vmatmul.mubr.bf16.gmra.mxu0 %v296
        %v820 = vpop.f32.mrf.mxu0
        %v821 = vadd.f32 0.0, %v820
        %v822 = vpop.f32.mrf.mxu0
        %v823 = vadd.f32 0.0, %v822
        %v824 = vpop.f32.mrf.mxu0
        %v825 = vadd.f32 0.0, %v824
        %v826 = vpop.f32.mrf.mxu0
        %v827 = vadd.f32 0.0, %v826
        %828 = vmatprep.mubr.bf16.mxu0 0
        %829 = vmatmul.mubr.bf16.gmra.mxu0 %v297
        %v830 = vpop.f32.mrf.mxu0
        %v831 = vadd.f32 0.0, %v830
        %v832 = vpop.f32.mrf.mxu0
        %v833 = vadd.f32 0.0, %v832
        %v834 = vpop.f32.mrf.mxu0
        %v835 = vadd.f32 0.0, %v834
        %v836 = vpop.f32.mrf.mxu0
        %v837 = vadd.f32 0.0, %v836
        %838 = vmatprep.mubr.bf16.mxu0 0
        %839 = vmatmul.mubr.bf16.gmra.mxu0 %v298
        %v840 = vpop.f32.mrf.mxu0
        %v841 = vadd.f32 0.0, %v840
        %v842 = vpop.f32.mrf.mxu0
        %v843 = vadd.f32 0.0, %v842
        %v844 = vpop.f32.mrf.mxu0
        %v845 = vadd.f32 0.0, %v844
        %v846 = vpop.f32.mrf.mxu0
        %v847 = vadd.f32 0.0, %v846
        %848 = vmatprep.mubr.bf16.mxu0 0
        %849 = vmatmul.mubr.bf16.gmra.mxu0 %v299
        %v850 = vpop.f32.mrf.mxu0
        %v851 = vadd.f32 0.0, %v850
        %v852 = vpop.f32.mrf.mxu0
        %v853 = vadd.f32 0.0, %v852
        %v854 = vpop.f32.mrf.mxu0
        %v855 = vadd.f32 0.0, %v854
        %v856 = vpop.f32.mrf.mxu0
        %v857 = vadd.f32 0.0, %v856
        %858 = vmatprep.mubr.bf16.mxu0 0
        %859 = vmatmul.mubr.bf16.gmra.mxu0 %v300
        %v860 = vpop.f32.mrf.mxu0
        %v861 = vadd.f32 0.0, %v860
        %v862 = vpop.f32.mrf.mxu0
        %v863 = vadd.f32 0.0, %v862
        %v864 = vpop.f32.mrf.mxu0
        %v865 = vadd.f32 0.0, %v864
        %v866 = vpop.f32.mrf.mxu0
        %v867 = vadd.f32 0.0, %v866
        %868 = vmatprep.mubr.bf16.mxu0 0
        %869 = vmatmul.mubr.bf16.gmra.mxu0 %v301
        %v870 = vpop.f32.mrf.mxu0
        %v871 = vadd.f32 0.0, %v870
        %v872 = vpop.f32.mrf.mxu0
        %v873 = vadd.f32 0.0, %v872
        %v874 = vpop.f32.mrf.mxu0
        %v875 = vadd.f32 0.0, %v874
        %v876 = vpop.f32.mrf.mxu0
        %v877 = vadd.f32 0.0, %v876
        %878 = vmatprep.mubr.bf16.mxu0 0
        %879 = vmatmul.mubr.bf16.gmra.mxu0 %v302
        %v880 = vpop.f32.mrf.mxu0
        %v881 = vadd.f32 0.0, %v880
        %v882 = vpop.f32.mrf.mxu0
        %v883 = vadd.f32 0.0, %v882
        %v884 = vpop.f32.mrf.mxu0
        %v885 = vadd.f32 0.0, %v884
        %v886 = vpop.f32.mrf.mxu0
        %v887 = vadd.f32 0.0, %v886
        %888 = vmatprep.mubr.bf16.mxu0 0
        %889 = vmatmul.mubr.bf16.gmra.mxu0 %v303
        %v890 = vpop.f32.mrf.mxu0
        %v891 = vadd.f32 0.0, %v890
        %v892 = vpop.f32.mrf.mxu0
        %v893 = vadd.f32 0.0, %v892
        %v894 = vpop.f32.mrf.mxu0
        %v895 = vpop.f32.mrf.mxu0
        %896 = vdwg.mxu0
        %vm963 = vcmask 1046528
        %v964 = vrot.slane %v731, 1
        %v965 = vrot.slane %v735, 1
        %v966 = vsel %vm963, %v964, %v965
        %v967 = vrot.slane %v733, 1
        %v968 = vrot.slane %v737, 1
        %v969 = vsel %vm963, %v967, %v968
        %v970 = vrot.slane %v741, 1
        %v971 = vsel %vm963, %v965, %v970
        %v972 = vrot.slane %v743, 1
        %v973 = vsel %vm963, %v968, %v972
        %v974 = vrot.slane %v745, 1
        %v975 = vsel %vm963, %v970, %v974
        %v976 = vrot.slane %v747, 1
        %v977 = vsel %vm963, %v972, %v976
        %v978 = vrot.slane %v751, 1
        %v979 = vsel %vm963, %v974, %v978
        %v980 = vrot.slane %v753, 1
        %v981 = vsel %vm963, %v976, %v980
        %v982 = vrot.slane %v755, 1
        %v983 = vsel %vm963, %v978, %v982
        %v984 = vrot.slane %v757, 1
        %v985 = vsel %vm963, %v980, %v984
        %v986 = vrot.slane %v761, 1
        %v987 = vsel %vm963, %v982, %v986
        %v988 = vrot.slane %v763, 1
        %v989 = vsel %vm963, %v984, %v988
        %v990 = vrot.slane %v765, 1
        %v991 = vsel %vm963, %v986, %v990
        %v992 = vrot.slane %v767, 1
        %v993 = vsel %vm963, %v988, %v992
        %v994 = vrot.slane %v771, 1
        %v995 = vsel %vm963, %v990, %v994
        %v996 = vrot.slane %v773, 1
        %v997 = vsel %vm963, %v992, %v996
        %v998 = vrot.slane %v775, 1
        %v999 = vsel %vm963, %v994, %v998
        %v1000 = vrot.slane %v777, 1
        %v1001 = vsel %vm963, %v996, %v1000
        %v1002 = vrot.slane %v781, 1
        %v1003 = vsel %vm963, %v998, %v1002
        %v1004 = vrot.slane %v783, 1
        %v1005 = vsel %vm963, %v1000, %v1004
        %v1006 = vrot.slane %v785, 1
        %v1007 = vsel %vm963, %v1002, %v1006
        %v1008 = vrot.slane %v787, 1
        %v1009 = vsel %vm963, %v1004, %v1008
        %v1010 = vrot.slane %v791, 1
        %v1011 = vsel %vm963, %v1006, %v1010
        %v1012 = vrot.slane %v793, 1
        %v1013 = vsel %vm963, %v1008, %v1012
        %v1014 = vrot.slane %v795, 1
        %v1015 = vsel %vm963, %v1010, %v1014
        %v1016 = vrot.slane %v797, 1
        %v1017 = vsel %vm963, %v1012, %v1016
        %v1018 = vrot.slane %v801, 1
        %v1019 = vsel %vm963, %v1014, %v1018
        %v1020 = vrot.slane %v803, 1
        %v1021 = vsel %vm963, %v1016, %v1020
        %v1022 = vrot.slane %v805, 1
        %v1023 = vsel %vm963, %v1018, %v1022
        %v1024 = vrot.slane %v807, 1
        %v1025 = vsel %vm963, %v1020, %v1024
        %v1026 = vrot.slane %v811, 1
        %v1027 = vsel %vm963, %v1022, %v1026
        %v1028 = vrot.slane %v813, 1
        %v1029 = vsel %vm963, %v1024, %v1028
        %v1030 = vrot.slane %v815, 1
        %v1031 = vsel %vm963, %v1026, %v1030
        %v1032 = vrot.slane %v817, 1
        %v1033 = vsel %vm963, %v1028, %v1032
        %v1034 = vrot.slane %v821, 1
        %v1035 = vsel %vm963, %v1030, %v1034
        %v1036 = vrot.slane %v823, 1
        %v1037 = vsel %vm963, %v1032, %v1036
        %v1038 = vrot.slane %v825, 1
        %v1039 = vsel %vm963, %v1034, %v1038
        %v1040 = vrot.slane %v827, 1
        %v1041 = vsel %vm963, %v1036, %v1040
        %v1042 = vrot.slane %v831, 1
        %v1043 = vsel %vm963, %v1038, %v1042
        %v1044 = vrot.slane %v833, 1
        %v1045 = vsel %vm963, %v1040, %v1044
        %v1046 = vrot.slane %v835, 1
        %v1047 = vsel %vm963, %v1042, %v1046
        %v1048 = vrot.slane %v837, 1
        %v1049 = vsel %vm963, %v1044, %v1048
        %v1050 = vrot.slane %v841, 1
        %v1051 = vsel %vm963, %v1046, %v1050
        %v1052 = vrot.slane %v843, 1
        %v1053 = vsel %vm963, %v1048, %v1052
        %v1054 = vrot.slane %v845, 1
        %v1055 = vsel %vm963, %v1050, %v1054
        %v1056 = vrot.slane %v847, 1
        %v1057 = vsel %vm963, %v1052, %v1056
        %v1058 = vrot.slane %v851, 1
        %v1059 = vsel %vm963, %v1054, %v1058
        %v1060 = vrot.slane %v853, 1
        %v1061 = vsel %vm963, %v1056, %v1060
        %v1062 = vrot.slane %v855, 1
        %v1063 = vsel %vm963, %v1058, %v1062
        %v1064 = vrot.slane %v857, 1
        %v1065 = vsel %vm963, %v1060, %v1064
        %v1066 = vrot.slane %v861, 1
        %v1067 = vsel %vm963, %v1062, %v1066
        %v1068 = vrot.slane %v863, 1
        %v1069 = vsel %vm963, %v1064, %v1068
        %v1070 = vrot.slane %v865, 1
        %v1071 = vsel %vm963, %v1066, %v1070
        %v1072 = vrot.slane %v867, 1
        %v1073 = vsel %vm963, %v1068, %v1072
        %v1074 = vrot.slane %v871, 1
        %v1075 = vsel %vm963, %v1070, %v1074
        %v1076 = vrot.slane %v873, 1
        %v1077 = vsel %vm963, %v1072, %v1076
        %v1078 = vrot.slane %v875, 1
        %v1079 = vsel %vm963, %v1074, %v1078
        %v1080 = vrot.slane %v877, 1
        %v1081 = vsel %vm963, %v1076, %v1080
        %v1082 = vrot.slane %v881, 1
        %v1083 = vsel %vm963, %v1078, %v1082
        %v1084 = vrot.slane %v883, 1
        %v1085 = vsel %vm963, %v1080, %v1084
        %v1086 = vrot.slane %v885, 1
        %v1087 = vsel %vm963, %v1082, %v1086
        %v1088 = vrot.slane %v887, 1
        %v1089 = vsel %vm963, %v1084, %v1088
        %v1090 = vrot.slane %v891, 1
        %v1091 = vsel %vm963, %v1086, %v1090
        %v1092 = vrot.slane %v893, 1
        %v1093 = vsel %vm963, %v1088, %v1092
        %v1158 = vadd.f32 %v436, %v966
        %v1159 = vadd.f32 %v438, %v969
        %v1160 = vadd.f32 %v440, %v971
        %v1161 = vadd.f32 %v442, %v973
        %v1162 = vadd.f32 %v446, %v975
        %v1163 = vadd.f32 %v448, %v977
        %v1164 = vadd.f32 %v450, %v979
        %v1165 = vadd.f32 %v452, %v981
        %v1166 = vadd.f32 %v456, %v983
        %v1167 = vadd.f32 %v458, %v985
        %v1168 = vadd.f32 %v460, %v987
        %v1169 = vadd.f32 %v462, %v989
        %v1170 = vadd.f32 %v466, %v991
        %v1171 = vadd.f32 %v468, %v993
        %v1172 = vadd.f32 %v470, %v995
        %v1173 = vadd.f32 %v472, %v997
        %v1174 = vadd.f32 %v476, %v999
        %v1175 = vadd.f32 %v478, %v1001
        %v1176 = vadd.f32 %v480, %v1003
        %v1177 = vadd.f32 %v482, %v1005
        %v1178 = vadd.f32 %v486, %v1007
        %v1179 = vadd.f32 %v488, %v1009
        %v1180 = vadd.f32 %v490, %v1011
        %v1181 = vadd.f32 %v492, %v1013
        %v1182 = vadd.f32 %v496, %v1015
        %v1183 = vadd.f32 %v498, %v1017
        %v1184 = vadd.f32 %v500, %v1019
        %v1185 = vadd.f32 %v502, %v1021
        %v1186 = vadd.f32 %v506, %v1023
        %v1187 = vadd.f32 %v508, %v1025
        %v1188 = vadd.f32 %v510, %v1027
        %v1189 = vadd.f32 %v512, %v1029
        %v1190 = vadd.f32 %v516, %v1031
        %v1191 = vadd.f32 %v518, %v1033
        %v1192 = vadd.f32 %v520, %v1035
        %v1193 = vadd.f32 %v522, %v1037
        %v1194 = vadd.f32 %v526, %v1039
        %v1195 = vadd.f32 %v528, %v1041
        %v1196 = vadd.f32 %v530, %v1043
        %v1197 = vadd.f32 %v532, %v1045
        %v1198 = vadd.f32 %v536, %v1047
        %v1199 = vadd.f32 %v538, %v1049
        %v1200 = vadd.f32 %v540, %v1051
        %v1201 = vadd.f32 %v542, %v1053
        %v1202 = vadd.f32 %v546, %v1055
        %v1203 = vadd.f32 %v548, %v1057
        %v1204 = vadd.f32 %v550, %v1059
        %v1205 = vadd.f32 %v552, %v1061
        %v1206 = vadd.f32 %v556, %v1063
        %v1207 = vadd.f32 %v558, %v1065
        %v1208 = vadd.f32 %v560, %v1067
        %v1209 = vadd.f32 %v562, %v1069
        %v1210 = vadd.f32 %v566, %v1071
        %v1211 = vadd.f32 %v568, %v1073
        %v1212 = vadd.f32 %v570, %v1075
        %v1213 = vadd.f32 %v572, %v1077
        %v1214 = vadd.f32 %v576, %v1079
        %v1215 = vadd.f32 %v578, %v1081
        %v1216 = vadd.f32 %v580, %v1083
        %v1217 = vadd.f32 %v582, %v1085
        %v1218 = vadd.f32 %v586, %v1087
        %v1219 = vadd.f32 %v588, %v1089
        %v1220 = vadd.f32 %v590, %v1091
        %v1221 = vadd.f32 %v592, %v1093
        %1222 = vxpose.xlu0.b32.start [1/16] %v1158, 128
        %1223 = vxpose.xlu0.b32.cont [2/16] %v1160, 128
        %1224 = vxpose.xlu0.b32.cont [3/16] %v1162, 128
        %1225 = vxpose.xlu0.b32.cont [4/16] %v1164, 128
        %1226 = vxpose.xlu0.b32.cont [5/16] %v1166, 128
        %1227 = vxpose.xlu0.b32.cont [6/16] %v1168, 128
        %1228 = vxpose.xlu0.b32.cont [7/16] %v1170, 128
        %1229 = vxpose.xlu0.b32.cont [8/16] %v1172, 128
        %1230 = vxpose.xlu0.b32.cont [9/16] %v1174, 128
        %1231 = vxpose.xlu0.b32.cont [10/16] %v1176, 128
        %1232 = vxpose.xlu0.b32.cont [11/16] %v1178, 128
        %1233 = vxpose.xlu0.b32.cont [12/16] %v1180, 128
        %1234 = vxpose.xlu0.b32.cont [13/16] %v1182, 128
        %1235 = vxpose.xlu0.b32.cont [14/16] %v1184, 128
        %1236 = vxpose.xlu0.b32.cont [15/16] %v1186, 128
        %1237 = vxpose.xlu0.b32.end [16/16] %v1188, 128
        %v1238 = vpop.trf.xlu0
        %v1239 = vpop.trf.xlu0
        %v1240 = vpop.trf.xlu0
        %v1241 = vpop.trf.xlu0
        %v1242 = vpop.trf.xlu0
        %v1243 = vpop.trf.xlu0
        %v1244 = vpop.trf.xlu0
        %v1245 = vpop.trf.xlu0
        %v1246 = vpop.trf.xlu0
        %v1247 = vpop.trf.xlu0
        %v1248 = vpop.trf.xlu0
        %v1249 = vpop.trf.xlu0
        %v1250 = vpop.trf.xlu0
        %v1251 = vpop.trf.xlu0
        %v1252 = vpop.trf.xlu0
        %v1253 = vpop.trf.xlu0
        %1254 = vxpose.xlu0.b32.start [1/16] %v1159, 128
        %1255 = vxpose.xlu0.b32.cont [2/16] %v1161, 128
        %1256 = vxpose.xlu0.b32.cont [3/16] %v1163, 128
        %1257 = vxpose.xlu0.b32.cont [4/16] %v1165, 128
        %1258 = vxpose.xlu0.b32.cont [5/16] %v1167, 128
        %1259 = vxpose.xlu0.b32.cont [6/16] %v1169, 128
        %1260 = vxpose.xlu0.b32.cont [7/16] %v1171, 128
        %1261 = vxpose.xlu0.b32.cont [8/16] %v1173, 128
        %1262 = vxpose.xlu0.b32.cont [9/16] %v1175, 128
        %1263 = vxpose.xlu0.b32.cont [10/16] %v1177, 128
        %1264 = vxpose.xlu0.b32.cont [11/16] %v1179, 128
        %1265 = vxpose.xlu0.b32.cont [12/16] %v1181, 128
        %1266 = vxpose.xlu0.b32.cont [13/16] %v1183, 128
        %1267 = vxpose.xlu0.b32.cont [14/16] %v1185, 128
        %1268 = vxpose.xlu0.b32.cont [15/16] %v1187, 128
        %1269 = vxpose.xlu0.b32.end [16/16] %v1189, 128
        %v1270 = vpop.trf.xlu0
        %v1271 = vpop.trf.xlu0
        %v1272 = vpop.trf.xlu0
        %v1273 = vpop.trf.xlu0
        %v1274 = vpop.trf.xlu0
        %v1275 = vpop.trf.xlu0
        %v1276 = vpop.trf.xlu0
        %v1277 = vpop.trf.xlu0
        %v1278 = vpop.trf.xlu0
        %v1279 = vpop.trf.xlu0
        %v1280 = vpop.trf.xlu0
        %v1281 = vpop.trf.xlu0
        %v1282 = vpop.trf.xlu0
        %v1283 = vpop.trf.xlu0
        %v1284 = vpop.trf.xlu0
        %v1285 = vpop.trf.xlu0
        %1286 = vxpose.xlu0.b32.start [1/16] %v1190, 128
        %1287 = vxpose.xlu0.b32.cont [2/16] %v1192, 128
        %1288 = vxpose.xlu0.b32.cont [3/16] %v1194, 128
        %1289 = vxpose.xlu0.b32.cont [4/16] %v1196, 128
        %1290 = vxpose.xlu0.b32.cont [5/16] %v1198, 128
        %1291 = vxpose.xlu0.b32.cont [6/16] %v1200, 128
        %1292 = vxpose.xlu0.b32.cont [7/16] %v1202, 128
        %1293 = vxpose.xlu0.b32.cont [8/16] %v1204, 128
        %1294 = vxpose.xlu0.b32.cont [9/16] %v1206, 128
        %1295 = vxpose.xlu0.b32.cont [10/16] %v1208, 128
        %1296 = vxpose.xlu0.b32.cont [11/16] %v1210, 128
        %1297 = vxpose.xlu0.b32.cont [12/16] %v1212, 128
        %1298 = vxpose.xlu0.b32.cont [13/16] %v1214, 128
        %1299 = vxpose.xlu0.b32.cont [14/16] %v1216, 128
        %1300 = vxpose.xlu0.b32.cont [15/16] %v1218, 128
        %1301 = vxpose.xlu0.b32.end [16/16] %v1220, 128
        %v1302 = vpop.trf.xlu0
        %v1303 = vpop.trf.xlu0
        %v1304 = vpop.trf.xlu0
        %v1305 = vpop.trf.xlu0
        %v1306 = vpop.trf.xlu0
        %v1307 = vpop.trf.xlu0
        %v1308 = vpop.trf.xlu0
        %v1309 = vpop.trf.xlu0
        %v1310 = vpop.trf.xlu0
        %v1311 = vpop.trf.xlu0
        %v1312 = vpop.trf.xlu0
        %v1313 = vpop.trf.xlu0
        %v1314 = vpop.trf.xlu0
        %v1315 = vpop.trf.xlu0
        %v1316 = vpop.trf.xlu0
        %v1317 = vpop.trf.xlu0
        %1318 = vxpose.xlu0.b32.start [1/16] %v1191, 128
        %1319 = vxpose.xlu0.b32.cont [2/16] %v1193, 128
        %1320 = vxpose.xlu0.b32.cont [3/16] %v1195, 128
        %1321 = vxpose.xlu0.b32.cont [4/16] %v1197, 128
        %1322 = vxpose.xlu0.b32.cont [5/16] %v1199, 128
        %1323 = vxpose.xlu0.b32.cont [6/16] %v1201, 128
        %1324 = vxpose.xlu0.b32.cont [7/16] %v1203, 128
        %1325 = vxpose.xlu0.b32.cont [8/16] %v1205, 128
        %1326 = vxpose.xlu0.b32.cont [9/16] %v1207, 128
        %1327 = vxpose.xlu0.b32.cont [10/16] %v1209, 128
        %1328 = vxpose.xlu0.b32.cont [11/16] %v1211, 128
        %1329 = vxpose.xlu0.b32.cont [12/16] %v1213, 128
        %1330 = vxpose.xlu0.b32.cont [13/16] %v1215, 128
        %1331 = vxpose.xlu0.b32.cont [14/16] %v1217, 128
        %1332 = vxpose.xlu0.b32.cont [15/16] %v1219, 128
        %1333 = vxpose.xlu0.b32.end [16/16] %v1221, 128
        %v1334 = vpop.trf.xlu0
        %v1335 = vpop.trf.xlu0
        %v1336 = vpop.trf.xlu0
        %v1337 = vpop.trf.xlu0
        %v1338 = vpop.trf.xlu0
        %v1339 = vpop.trf.xlu0
        %v1340 = vpop.trf.xlu0
        %v1341 = vpop.trf.xlu0
        %v1342 = vpop.trf.xlu0
        %v1343 = vpop.trf.xlu0
        %v1344 = vpop.trf.xlu0
        %v1345 = vpop.trf.xlu0
        %v1346 = vpop.trf.xlu0
        %v1347 = vpop.trf.xlu0
        %v1348 = vpop.trf.xlu0
        %v1349 = vpop.trf.xlu0
        %v1350 = vlaneseq
        %v1351 = vshrl.u32 %v1350, 7
        %v1352 = vadd.s32 %v1351, 8
        %v1353 = vadd.s32 %v1351, 16
        %v1354 = vadd.s32 %v1351, 24
        %v1355 = vadd.s32 %v1351, 32
        %v1356 = vadd.s32 %v1351, 40
        %v1357 = vadd.s32 %v1351, 48
        %v1358 = vadd.s32 %v1351, 56
        %v1359 = vadd.s32 %v1351, 64
        %v1360 = vadd.s32 %v1351, 72
        %v1361 = vadd.s32 %v1351, 80
        %v1362 = vadd.s32 %v1351, 88
        %v1363 = vadd.s32 %v1351, 96
        %v1364 = vadd.s32 %v1351, 104
        %v1365 = vadd.s32 %v1351, 112
        %v1366 = vadd.s32 %v1351, 120
        %vm1367 = vcmp.eq.s32.totalorder %v1351, 0
        %vm1368 = vcmp.eq.s32.totalorder %v1352, 0
        %vm1369 = vcmp.eq.s32.totalorder %v1353, 0
        %vm1370 = vcmp.eq.s32.totalorder %v1354, 0
        %vm1371 = vcmp.eq.s32.totalorder %v1355, 0
        %vm1372 = vcmp.eq.s32.totalorder %v1356, 0
        %vm1373 = vcmp.eq.s32.totalorder %v1357, 0
        %vm1374 = vcmp.eq.s32.totalorder %v1358, 0
        %vm1375 = vcmp.eq.s32.totalorder %v1359, 0
        %vm1376 = vcmp.eq.s32.totalorder %v1360, 0
        %vm1377 = vcmp.eq.s32.totalorder %v1361, 0
        %vm1378 = vcmp.eq.s32.totalorder %v1362, 0
        %vm1379 = vcmp.eq.s32.totalorder %v1363, 0
        %vm1380 = vcmp.eq.s32.totalorder %v1364, 0
        %vm1381 = vcmp.eq.s32.totalorder %v1365, 0
        %vm1382 = vcmp.eq.s32.totalorder %v1366, 0
        %v1383 = vsel %vm1367, 0.0, %v1270
        %v1384 = vsel %vm1367, 0.0, %v1334
        %v1385 = vsel %vm1368, 0.0, %v1271
        %v1386 = vsel %vm1368, 0.0, %v1335
        %v1387 = vsel %vm1369, 0.0, %v1272
        %v1388 = vsel %vm1369, 0.0, %v1336
        %v1389 = vsel %vm1370, 0.0, %v1273
        %v1390 = vsel %vm1370, 0.0, %v1337
        %v1391 = vsel %vm1371, 0.0, %v1274
        %v1392 = vsel %vm1371, 0.0, %v1338
        %v1393 = vsel %vm1372, 0.0, %v1275
        %v1394 = vsel %vm1372, 0.0, %v1339
        %v1395 = vsel %vm1373, 0.0, %v1276
        %v1396 = vsel %vm1373, 0.0, %v1340
        %v1397 = vsel %vm1374, 0.0, %v1277
        %v1398 = vsel %vm1374, 0.0, %v1341
        %v1399 = vsel %vm1375, 0.0, %v1278
        %v1400 = vsel %vm1375, 0.0, %v1342
        %v1401 = vsel %vm1376, 0.0, %v1279
        %v1402 = vsel %vm1376, 0.0, %v1343
        %v1403 = vsel %vm1377, 0.0, %v1280
        %v1404 = vsel %vm1377, 0.0, %v1344
        %v1405 = vsel %vm1378, 0.0, %v1281
        %v1406 = vsel %vm1378, 0.0, %v1345
        %v1407 = vsel %vm1379, 0.0, %v1282
        %v1408 = vsel %vm1379, 0.0, %v1346
        %v1409 = vsel %vm1380, 0.0, %v1283
        %v1410 = vsel %vm1380, 0.0, %v1347
        %v1411 = vsel %vm1381, 0.0, %v1284
        %v1412 = vsel %vm1381, 0.0, %v1348
        %v1413 = vsel %vm1382, 0.0, %v1285
        %v1414 = vsel %vm1382, 0.0, %v1349
        %v1415 = vmul.f32 %v1238, %v1238
        %v1416 = vmul.f32 %v1302, %v1302
        %v1417 = vmul.f32 %v1239, %v1239
        %v1418 = vmul.f32 %v1303, %v1303
        %v1419 = vmul.f32 %v1240, %v1240
        %v1420 = vmul.f32 %v1304, %v1304
        %v1421 = vmul.f32 %v1241, %v1241
        %v1422 = vmul.f32 %v1305, %v1305
        %v1423 = vmul.f32 %v1242, %v1242
        %v1424 = vmul.f32 %v1306, %v1306
        %v1425 = vmul.f32 %v1243, %v1243
        %v1426 = vmul.f32 %v1307, %v1307
        %v1427 = vmul.f32 %v1244, %v1244
        %v1428 = vmul.f32 %v1308, %v1308
        %v1429 = vmul.f32 %v1245, %v1245
        %v1430 = vmul.f32 %v1309, %v1309
        %v1431 = vmul.f32 %v1246, %v1246
        %v1432 = vmul.f32 %v1310, %v1310
        %v1433 = vmul.f32 %v1247, %v1247
        %v1434 = vmul.f32 %v1311, %v1311
        %v1435 = vmul.f32 %v1248, %v1248
        %v1436 = vmul.f32 %v1312, %v1312
        %v1437 = vmul.f32 %v1249, %v1249
        %v1438 = vmul.f32 %v1313, %v1313
        %v1439 = vmul.f32 %v1250, %v1250
        %v1440 = vmul.f32 %v1314, %v1314
        %v1441 = vmul.f32 %v1251, %v1251
        %v1442 = vmul.f32 %v1315, %v1315
        %v1443 = vmul.f32 %v1252, %v1252
        %v1444 = vmul.f32 %v1316, %v1316
        %v1445 = vmul.f32 %v1253, %v1253
        %v1446 = vmul.f32 %v1317, %v1317
        %v1447 = vmul.f32 %v1383, %v1383
        %v1448 = vmul.f32 %v1384, %v1384
        %v1449 = vmul.f32 %v1385, %v1385
        %v1450 = vmul.f32 %v1386, %v1386
        %v1451 = vmul.f32 %v1387, %v1387
        %v1452 = vmul.f32 %v1388, %v1388
        %v1453 = vmul.f32 %v1389, %v1389
        %v1454 = vmul.f32 %v1390, %v1390
        %v1455 = vmul.f32 %v1391, %v1391
        %v1456 = vmul.f32 %v1392, %v1392
        %v1457 = vmul.f32 %v1393, %v1393
        %v1458 = vmul.f32 %v1394, %v1394
        %v1459 = vmul.f32 %v1395, %v1395
        %v1460 = vmul.f32 %v1396, %v1396
        %v1461 = vmul.f32 %v1397, %v1397
        %v1462 = vmul.f32 %v1398, %v1398
        %v1463 = vmul.f32 %v1399, %v1399
        %v1464 = vmul.f32 %v1400, %v1400
        %v1465 = vmul.f32 %v1401, %v1401
        %v1466 = vmul.f32 %v1402, %v1402
        %v1467 = vmul.f32 %v1403, %v1403
        %v1468 = vmul.f32 %v1404, %v1404
        %v1469 = vmul.f32 %v1405, %v1405
        %v1470 = vmul.f32 %v1406, %v1406
        %v1471 = vmul.f32 %v1407, %v1407
        %v1472 = vmul.f32 %v1408, %v1408
        %v1473 = vmul.f32 %v1409, %v1409
        %v1474 = vmul.f32 %v1410, %v1410
        %v1475 = vmul.f32 %v1411, %v1411
        %v1476 = vmul.f32 %v1412, %v1412
        %v1477 = vmul.f32 %v1413, %v1413
        %v1478 = vmul.f32 %v1414, %v1414
        %v1479 = vadd.f32 %v1415, %v1447
        %v1480 = vadd.f32 %v1416, %v1448
        %v1481 = vadd.f32 %v1417, %v1449
        %v1482 = vadd.f32 %v1418, %v1450
        %v1483 = vadd.f32 %v1419, %v1451
        %v1484 = vadd.f32 %v1420, %v1452
        %v1485 = vadd.f32 %v1421, %v1453
        %v1486 = vadd.f32 %v1422, %v1454
        %v1487 = vadd.f32 %v1423, %v1455
        %v1488 = vadd.f32 %v1424, %v1456
        %v1489 = vadd.f32 %v1425, %v1457
        %v1490 = vadd.f32 %v1426, %v1458
        %v1491 = vadd.f32 %v1427, %v1459
        %v1492 = vadd.f32 %v1428, %v1460
        %v1493 = vadd.f32 %v1429, %v1461
        %v1494 = vadd.f32 %v1430, %v1462
        %v1495 = vadd.f32 %v1431, %v1463
        %v1496 = vadd.f32 %v1432, %v1464
        %v1497 = vadd.f32 %v1433, %v1465
        %v1498 = vadd.f32 %v1434, %v1466
        %v1499 = vadd.f32 %v1435, %v1467
        %v1500 = vadd.f32 %v1436, %v1468
        %v1501 = vadd.f32 %v1437, %v1469
        %v1502 = vadd.f32 %v1438, %v1470
        %v1503 = vadd.f32 %v1439, %v1471
        %v1504 = vadd.f32 %v1440, %v1472
        %v1505 = vadd.f32 %v1441, %v1473
        %v1506 = vadd.f32 %v1442, %v1474
        %v1507 = vadd.f32 %v1443, %v1475
        %v1508 = vadd.f32 %v1444, %v1476
        %v1509 = vadd.f32 %v1445, %v1477
        %v1510 = vadd.f32 %v1446, %v1478
        %v1511 = vadd.f32 %v1479, 1e-18
        %v1512 = vadd.f32 %v1480, 1e-18
        %v1513 = vadd.f32 %v1481, 1e-18
        %v1514 = vadd.f32 %v1482, 1e-18
        %v1515 = vadd.f32 %v1483, 1e-18
        %v1516 = vadd.f32 %v1484, 1e-18
        %v1517 = vadd.f32 %v1485, 1e-18
        %v1518 = vadd.f32 %v1486, 1e-18
        %v1519 = vadd.f32 %v1487, 1e-18
        %v1520 = vadd.f32 %v1488, 1e-18
        %v1521 = vadd.f32 %v1489, 1e-18
        %v1522 = vadd.f32 %v1490, 1e-18
        %v1523 = vadd.f32 %v1491, 1e-18
        %v1524 = vadd.f32 %v1492, 1e-18
        %v1525 = vadd.f32 %v1493, 1e-18
        %v1526 = vadd.f32 %v1494, 1e-18
        %v1527 = vadd.f32 %v1495, 1e-18
        %v1528 = vadd.f32 %v1496, 1e-18
        %v1529 = vadd.f32 %v1497, 1e-18
        %v1530 = vadd.f32 %v1498, 1e-18
        %v1531 = vadd.f32 %v1499, 1e-18
        %v1532 = vadd.f32 %v1500, 1e-18
        %v1533 = vadd.f32 %v1501, 1e-18
        %v1534 = vadd.f32 %v1502, 1e-18
        %v1535 = vadd.f32 %v1503, 1e-18
        %v1536 = vadd.f32 %v1504, 1e-18
        %v1537 = vadd.f32 %v1505, 1e-18
        %v1538 = vadd.f32 %v1506, 1e-18
        %v1539 = vadd.f32 %v1507, 1e-18
        %v1540 = vadd.f32 %v1508, 1e-18
        %v1541 = vadd.f32 %v1509, 1e-18
        %v1542 = vadd.f32 %v1510, 1e-18
        %v1543 = vlog2.pop %v1511
        %v1544 = vmul.f32 %v1543, 0.6931472
        %v1545 = vlog2.pop %v1512
        %v1546 = vmul.f32 %v1545, 0.6931472
        %v1547 = vlog2.pop %v1513
        %v1548 = vmul.f32 %v1547, 0.6931472
        %v1549 = vlog2.pop %v1514
        %v1550 = vmul.f32 %v1549, 0.6931472
        %v1551 = vlog2.pop %v1515
        %v1552 = vmul.f32 %v1551, 0.6931472
        %v1553 = vlog2.pop %v1516
        %v1554 = vmul.f32 %v1553, 0.6931472
        %v1555 = vlog2.pop %v1517
        %v1556 = vmul.f32 %v1555, 0.6931472
        %v1557 = vlog2.pop %v1518
        %v1558 = vmul.f32 %v1557, 0.6931472
        %v1559 = vlog2.pop %v1519
        %v1560 = vmul.f32 %v1559, 0.6931472
        %v1561 = vlog2.pop %v1520
        %v1562 = vmul.f32 %v1561, 0.6931472
        %v1563 = vlog2.pop %v1521
        %v1564 = vmul.f32 %v1563, 0.6931472
        %v1565 = vlog2.pop %v1522
        %v1566 = vmul.f32 %v1565, 0.6931472
        %v1567 = vlog2.pop %v1523
        %v1568 = vmul.f32 %v1567, 0.6931472
        %v1569 = vlog2.pop %v1524
        %v1570 = vmul.f32 %v1569, 0.6931472
        %v1571 = vlog2.pop %v1525
        %v1572 = vmul.f32 %v1571, 0.6931472
        %v1573 = vlog2.pop %v1526
        %v1574 = vmul.f32 %v1573, 0.6931472
        %v1575 = vlog2.pop %v1527
        %v1576 = vmul.f32 %v1575, 0.6931472
        %v1577 = vlog2.pop %v1528
        %v1578 = vmul.f32 %v1577, 0.6931472
        %v1579 = vlog2.pop %v1529
        %v1580 = vmul.f32 %v1579, 0.6931472
        %v1581 = vlog2.pop %v1530
        %v1582 = vmul.f32 %v1581, 0.6931472
        %v1583 = vlog2.pop %v1531
        %v1584 = vmul.f32 %v1583, 0.6931472
        %v1585 = vlog2.pop %v1532
        %v1586 = vmul.f32 %v1585, 0.6931472
        %v1587 = vlog2.pop %v1533
        %v1588 = vmul.f32 %v1587, 0.6931472
        %v1589 = vlog2.pop %v1534
        %v1590 = vmul.f32 %v1589, 0.6931472
        %v1591 = vlog2.pop %v1535
        %v1592 = vmul.f32 %v1591, 0.6931472
        %v1593 = vlog2.pop %v1536
        %v1594 = vmul.f32 %v1593, 0.6931472
        %v1595 = vlog2.pop %v1537
        %v1596 = vmul.f32 %v1595, 0.6931472
        %v1597 = vlog2.pop %v1538
        %v1598 = vmul.f32 %v1597, 0.6931472
        %v1599 = vlog2.pop %v1539
        %v1600 = vmul.f32 %v1599, 0.6931472
        %v1601 = vlog2.pop %v1540
        %v1602 = vmul.f32 %v1601, 0.6931472
        %v1603 = vlog2.pop %v1541
        %v1604 = vmul.f32 %v1603, 0.6931472
        %v1605 = vlog2.pop %v1542
        %v1606 = vmul.f32 %v1605, 0.6931472
        %v1607 = vmul.f32 %v1544, 0.4342945
        %v1608 = vmul.f32 %v1546, 0.4342945
        %v1609 = vmul.f32 %v1548, 0.4342945
        %v1610 = vmul.f32 %v1550, 0.4342945
        %v1611 = vmul.f32 %v1552, 0.4342945
        %v1612 = vmul.f32 %v1554, 0.4342945
        %v1613 = vmul.f32 %v1556, 0.4342945
        %v1614 = vmul.f32 %v1558, 0.4342945
        %v1615 = vmul.f32 %v1560, 0.4342945
        %v1616 = vmul.f32 %v1562, 0.4342945
        %v1617 = vmul.f32 %v1564, 0.4342945
        %v1618 = vmul.f32 %v1566, 0.4342945
        %v1619 = vmul.f32 %v1568, 0.4342945
        %v1620 = vmul.f32 %v1570, 0.4342945
        %v1621 = vmul.f32 %v1572, 0.4342945
        %v1622 = vmul.f32 %v1574, 0.4342945
        %v1623 = vmul.f32 %v1576, 0.4342945
        %v1624 = vmul.f32 %v1578, 0.4342945
        %v1625 = vmul.f32 %v1580, 0.4342945
        %v1626 = vmul.f32 %v1582, 0.4342945
        %v1627 = vmul.f32 %v1584, 0.4342945
        %v1628 = vmul.f32 %v1586, 0.4342945
        %v1629 = vmul.f32 %v1588, 0.4342945
        %v1630 = vmul.f32 %v1590, 0.4342945
        %v1631 = vmul.f32 %v1592, 0.4342945
        %v1632 = vmul.f32 %v1594, 0.4342945
        %v1633 = vmul.f32 %v1596, 0.4342945
        %v1634 = vmul.f32 %v1598, 0.4342945
        %v1635 = vmul.f32 %v1600, 0.4342945
        %v1636 = vmul.f32 %v1602, 0.4342945
        %v1637 = vmul.f32 %v1604, 0.4342945
        %v1638 = vmul.f32 %v1606, 0.4342945
        %v1639 = vmul.f32 %v1607, 0.5
        %v1640 = vmul.f32 %v1608, 0.5
        %v1641 = vmul.f32 %v1609, 0.5
        %v1642 = vmul.f32 %v1610, 0.5
        %v1643 = vmul.f32 %v1611, 0.5
        %v1644 = vmul.f32 %v1612, 0.5
        %v1645 = vmul.f32 %v1613, 0.5
        %v1646 = vmul.f32 %v1614, 0.5
        %v1647 = vmul.f32 %v1615, 0.5
        %v1648 = vmul.f32 %v1616, 0.5
        %v1649 = vmul.f32 %v1617, 0.5
        %v1650 = vmul.f32 %v1618, 0.5
        %v1651 = vmul.f32 %v1619, 0.5
        %v1652 = vmul.f32 %v1620, 0.5
        %v1653 = vmul.f32 %v1621, 0.5
        %v1654 = vmul.f32 %v1622, 0.5
        %v1655 = vmul.f32 %v1623, 0.5
        %v1656 = vmul.f32 %v1624, 0.5
        %v1657 = vmul.f32 %v1625, 0.5
        %v1658 = vmul.f32 %v1626, 0.5
        %v1659 = vmul.f32 %v1627, 0.5
        %v1660 = vmul.f32 %v1628, 0.5
        %v1661 = vmul.f32 %v1629, 0.5
        %v1662 = vmul.f32 %v1630, 0.5
        %v1663 = vmul.f32 %v1631, 0.5
        %v1664 = vmul.f32 %v1632, 0.5
        %v1665 = vmul.f32 %v1633, 0.5
        %v1666 = vmul.f32 %v1634, 0.5
        %v1667 = vmul.f32 %v1635, 0.5
        %v1668 = vmul.f32 %v1636, 0.5
        %v1669 = vmul.f32 %v1637, 0.5
        %v1670 = vmul.f32 %v1638, 0.5
        %1671 = vst [vmem:[%s160] sm:$0xff] %v1639
        %1672 = vst [vmem:[%s160 + $0x8] sm:$0xff] %v1640
        %1673 = vst [vmem:[%s160 + $0x10] sm:$0xff] %v1641
        %1674 = vst [vmem:[%s160 + $0x18] sm:$0xff] %v1642
        %1675 = vst [vmem:[%s160 + $0x20] sm:$0xff] %v1643
        %1676 = vst [vmem:[%s160 + $0x28] sm:$0xff] %v1644
        %1677 = vst [vmem:[%s160 + $0x30] sm:$0xff] %v1645
        %1678 = vst [vmem:[%s160 + $0x38] sm:$0xff] %v1646
        %1679 = vst [vmem:[%s160 + $0x40] sm:$0xff] %v1647
        %1680 = vst [vmem:[%s160 + $0x48] sm:$0xff] %v1648
        %1681 = vst [vmem:[%s160 + $0x50] sm:$0xff] %v1649
        %1682 = vst [vmem:[%s160 + $0x58] sm:$0xff] %v1650
        %1683 = vst [vmem:[%s160 + $0x60] sm:$0xff] %v1651
        %1684 = vst [vmem:[%s160 + $0x68] sm:$0xff] %v1652
        %1685 = vst [vmem:[%s160 + $0x70] sm:$0xff] %v1653
        %1686 = vst [vmem:[%s160 + $0x78] sm:$0xff] %v1654
        %1687 = vst [vmem:[%s160 + $0x80] sm:$0xff] %v1655
        %1688 = vst [vmem:[%s160 + $0x88] sm:$0xff] %v1656
        %1689 = vst [vmem:[%s160 + $0x90] sm:$0xff] %v1657
        %1690 = vst [vmem:[%s160 + $0x98] sm:$0xff] %v1658
        %1691 = vst [vmem:[%s160 + $0xa0] sm:$0xff] %v1659
        %1692 = vst [vmem:[%s160 + $0xa8] sm:$0xff] %v1660
        %1693 = vst [vmem:[%s160 + $0xb0] sm:$0xff] %v1661
        %1694 = vst [vmem:[%s160 + $0xb8] sm:$0xff] %v1662
        %1695 = vst [vmem:[%s160 + $0xc0] sm:$0xff] %v1663
        %1696 = vst [vmem:[%s160 + $0xc8] sm:$0xff] %v1664
        %1697 = vst [vmem:[%s160 + $0xd0] sm:$0xff] %v1665
        %1698 = vst [vmem:[%s160 + $0xd8] sm:$0xff] %v1666
        %1699 = vst [vmem:[%s160 + $0xe0] sm:$0xff] %v1667
        %1700 = vst [vmem:[%s160 + $0xe8] sm:$0xff] %v1668
        %1701 = vst [vmem:[%s160 + $0xf0] sm:$0xff] %v1669
        %1702 = vst [vmem:[%s160 + $0xf8] sm:$0xff] %v1670
        %v1703 = vmul.f32 %v1270, %v1270
        %v1704 = vmul.f32 %v1334, %v1334
        %v1705 = vadd.f32 %v1703, 1e-18
        %v1706 = vadd.f32 %v1704, 1e-18
        %v1707 = vlog2.pop %v1705
        %v1708 = vmul.f32 %v1707, 0.6931472
        %v1709 = vlog2.pop %v1706
        %v1710 = vmul.f32 %v1709, 0.6931472
        %v1711 = vmul.f32 %v1708, 0.4342945
        %v1712 = vmul.f32 %v1710, 0.4342945
        %v1713 = vmul.f32 %v1711, 0.5
        %v1714 = vmul.f32 %v1712, 0.5
        %1715 = vst [vmem:[%s160 + $0x100] sm:$0xff] %v1713
        %1716 = vst [vmem:[%s160 + $0x108] sm:$0xff] %v1714
        %s1717 = sand.u32 %s87, 1
        %s1718 = scalar_lea.sflag [#allocation3], %s1717
        %s1719 = sand.u32 %s87, 1
        %s1720 = smul.addr %s1719, 272
        %s1721 = scalar_lea.vmem [#allocation2], %s1720
        // Predicated region
        $region29: #{tpu_custom_call.1} parent=27 // pred_check
          %p1722 = pneg %p97
        $region30: #{tpu_custom_call.1} parent=27 // pred_check_branch
          %1724 = sbr.rel (%p1722) target = $region32
        $region31: #{tpu_custom_call.1} parent=27 // pred_region
          %s1725 = smul.u32 2, %s21
          %s1727 = ssub.s32 4352, 4352
          %1728 = vsyncadd %s1718, %s1727
          %s1729 = smul.addr %s20, 34
          %s1730 = sadd.s32 %s1725, %s1729
          %s1731 = smul.addr %s1730, 128
          %s1732 = scalar_lea.hbm %s2, %s1731
          %s1733 = sshll.u32 %s1721, 4
          %s1734 = int_to_ptr.vmem [resolvable:$true] %s1733
          %1739 = dma.vmem_to_hbm [thread:$0]  %s1734, 4352, %s1732, %s1718, 256, 256, 16
        $region32: #{tpu_custom_call.1} parent=27 // pred_fallthru
          _
      $region28: #{tpu_custom_call.1} parent=5 // pred_fallthru
        _
      %p1740 = scmp.le.s32.totalorder 2, %s11
      // Predicated region
      $region33: #{tpu_custom_call.1} parent=5 // pred_check
        %p1741 = pneg %p1740
      $region34: #{tpu_custom_call.1} parent=5 // pred_check_branch
        %1743 = sbr.rel (%p1741) target = $region36
      $region35: #{tpu_custom_call.1} parent=5 // pred_region
        %s1744 = ssub.s32 %s11, 2
        // Predicated region
        $region37: #{tpu_custom_call.1} parent=35 // pred_check
          %p1745 = pneg %p103
        $region38: #{tpu_custom_call.1} parent=35 // pred_check_branch
          %1747 = sbr.rel (%p1745) target = $region40
        $region39: #{tpu_custom_call.1} parent=35 // pred_region
          %s1748 = sand.u32 %s88, 1
          %s1749 = scalar_lea.sflag [#allocation3], %s1748
          %s1750 = sand.u32 %s88, 1
          %s1751 = smul.addr %s1750, 272
          %s1752 = scalar_lea.vmem [#allocation2], %s1751
          %1753 = dma.done %s1749, 4352
        $region40: #{tpu_custom_call.1} parent=35 // pred_fallthru
          _
      $region36: #{tpu_custom_call.1} parent=5 // pred_fallthru
        _
    $region6: #{tpu_custom_call.1} parent=1 // loop_footer
      %s15 = sadd.s32 1, %s11
    $region7: #{tpu_custom_call.1} parent=1 // loop_footer_branch
      %10 = sbr.rel target = $region3
    $region8: #{tpu_custom_call.1} parent=1 // loop_exit
      _
    %1754 = vsyncpa [#allocation3], 1
    %s1755 = scalar_lea.sflag [#allocation3], 1
    %1756 = vsyncpa %s1755, 1

</llo_original>
